<compile_context>
chip_gen: v6e
topology: v6e:2x2x1
jax: 0.10.0
libtpu: 0.0.40
codegen_flags: <defaults>
</compile_context>

<pallas_src>
import jax
import jax.numpy as jnp
from jax.experimental import pallas as pl
from jax.experimental.pallas import tpu as pltpu

# Logical (torch) layer dims.
DIMS = [784, 512, 256, 128, 64, 10]


def _round_up(x, m):
    return (x + m - 1) // m * m


# Lane-padded output dims per layer (multiples of 128); input dims chain from
# the previous layer's padded output, except layer 1 which keeps K=784.
OUT_PAD = [_round_up(d, 128) for d in DIMS[1:]]   # [512, 256, 128, 128, 128]
IN_PAD = [DIMS[0]] + OUT_PAD[:-1]                 # [784, 512, 256, 128, 128]

DEFAULT_TB = 1024  # batch-tile rows per grid step (amortizes pipeline overhead)


# ----------------------------------------------------------------------------
# Kernel
# ----------------------------------------------------------------------------
def mlp_kernel(x_ref,
               w1_ref, b1_ref,
               w2_ref, b2_ref,
               w3_ref, b3_ref,
               w4_ref, b4_ref,
               w5_ref, b5_ref,
               out_ref):
    """One (TB, 784) batch tile through the fused 5-layer MLP.

    The input tile is read in its original dtype and cast to the compute dtype
    in VMEM.  MXU matmuls accumulate in f32; bias-add + ReLU run on the VPU in
    f32; hidden activations are cast back to the compute dtype between layers.
    Weights/biases are VMEM-resident across all grid steps.
    """
    compute_dtype = w1_ref.dtype
    h = x_ref[...].astype(compute_dtype)   # in-VMEM cast (no wrapper copy of x)

    # Layers 1-4: matmul (f32 accumulation) + bias + ReLU.
    for w_ref, b_ref in ((w1_ref, b1_ref), (w2_ref, b2_ref),
                         (w3_ref, b3_ref), (w4_ref, b4_ref)):
        h = jnp.dot(h, w_ref[...], preferred_element_type=jnp.float32) + b_ref[...]
        h = jnp.maximum(h, 0.0).astype(compute_dtype)

    # Layer 5: logits (no ReLU), kept in f32 for the output block.
    h = jnp.dot(h, w5_ref[...], preferred_element_type=jnp.float32) + b5_ref[...]
    out_ref[...] = h.astype(out_ref.dtype)


# ----------------------------------------------------------------------------
# Wrapper
# ----------------------------------------------------------------------------
def _vmem_limit_bytes(tb, x_itemsize, flat_params):
    """Size the scoped-VMEM limit from the real footprint (capped for v7x)."""
    x_tile = tb * DIMS[0] * x_itemsize            # input tile, original dtype
    out_tile = tb * OUT_PAD[-1] * 4               # f32 logits tile
    weights = sum(int(p.size) * p.dtype.itemsize for p in flat_params)
    interm = tb * (OUT_PAD[0] + OUT_PAD[1]) * 4   # largest live f32 intermediates
    footprint = 2 * x_tile + 2 * out_tile + 2 * weights + interm
    # 2x headroom for compiler scratch, but stay well under 64 MiB/TC (v7x).
    return int(min(max(2 * footprint, 8 << 20), 48 << 20))


def mlp_forward(x, padded_params, *, tb=DEFAULT_TB, core_parallel=False):
    """x: anything flattening to (-1, 784).  padded_params: from prepare_params()."""
    x2d = x.reshape(-1, DIMS[0])
    B = x2d.shape[0]
    n_out_pad = OUT_PAD[-1]

    # Clamp the batch tile for small batches (no dead MXU work / writeback);
    # keep it a multiple of 8 for sublane alignment.
    tb = max(8, min(tb, _round_up(B, 8)))
    grid = (pl.cdiv(B, tb),)   # ragged last tile handled by clipped block DMAs

    flat_params = [p for wb in padded_params for p in wb]

    def const_spec(a):
        # Full-array block, same block every grid step -> stays resident in VMEM.
        return pl.BlockSpec(a.shape, lambda i: (0,) * a.ndim)

    in_specs = [pl.BlockSpec((tb, DIMS[0]), lambda i: (i, 0))]   # 784 == full dim
    in_specs += [const_spec(p) for p in flat_params]
    out_spec = pl.BlockSpec((tb, n_out_pad), lambda i: (i, 0))

    flops = 2 * B * sum(IN_PAD[l] * OUT_PAD[l] for l in range(5))
    bytes_accessed = (int(x2d.size) * x2d.dtype.itemsize
                      + sum(int(p.size) * p.dtype.itemsize for p in flat_params)
                      + B * n_out_pad * 4)

    if core_parallel:
        # v7x: explicitly shard the batch-tile axis across the two TensorCores
        # (each TC then holds its own ~1.2 MiB bf16 copy of the weights).
        dim_sem = (pltpu.CORE_PARALLEL,)
    else:
        dim_sem = ("parallel",)

    out = pl.pallas_call(
        mlp_kernel,
        out_shape=jax.ShapeDtypeStruct((B, n_out_pad), jnp.float32),
        grid=grid,
        in_specs=in_specs,
        out_specs=out_spec,
        compiler_params=pltpu.CompilerParams(
            dimension_semantics=dim_sem,
            vmem_limit_bytes=_vmem_limit_bytes(tb, x2d.dtype.itemsize, flat_params),
        ),
        cost_estimate=pl.CostEstimate(
            flops=flops, transcendentals=0, bytes_accessed=bytes_accessed),
    )(x2d, *flat_params)

    # Slice away the lane padding of the 10 logits (downstream code that only
    # needs argmax could consume the padded (B, 128) block directly instead).
    return out[:, :DIMS[-1]]


# ----------------------------------------------------------------------------
# Params
# ----------------------------------------------------------------------------
def init_params(key):
    """Deterministic init matching torch.nn.Linear shapes.
    torch weight is (out, in); we store transposed (in, out) so y = x @ W + b."""
    params = []
    for i in range(len(DIMS) - 1):
        fan_in, fan_out = DIMS[i], DIMS[i + 1]
        key, kw, kb = jax.random.split(key, 3)
        bound = 1.0 / jnp.sqrt(fan_in)
        w = jax.random.uniform(kw, (fan_in, fan_out), jnp.float32, -bound, bound)
        b = jax.random.uniform(kb, (fan_out,), jnp.float32, -bound, bound)
        params.append((w, b))
    return params


def prepare_params(params, compute_dtype=jnp.bfloat16):
    """Zero-pad every layer to lane-friendly dims (layer-1 K stays 784) and
    cast the weights to the compute dtype once.  Biases stay f32 and are added
    after the f32-accumulated matmul."""
    prepared = []
    for i, (w, b) in enumerate(params):
        in_p, out_p = IN_PAD[i], OUT_PAD[i]
        w_p = jnp.zeros((in_p, out_p), jnp.float32).at[:w.shape[0], :w.shape[1]].set(w)
        b_p = jnp.zeros((1, out_p), jnp.float32).at[0, :b.shape[0]].set(b)
        prepared.append((w_p.astype(compute_dtype), b_p))
    return prepared


# ----------------------------------------------------------------------------
# References
# ----------------------------------------------------------------------------
def mlp_reference_f32(x, params):
    """Pure-f32 reference with exact torch semantics."""
    h = x.reshape(-1, DIMS[0]).astype(jnp.float32)
    for i, (w, b) in enumerate(params):
        h = h @ w + b
        if i < len(params) - 1:
            h = jnp.maximum(h, 0.0)
    return h


def mlp_reference_matched(x, params, compute_dtype):
    """Reference that uses the same cast/accumulate schedule as the kernel."""
    h = x.reshape(-1, DIMS[0]).astype(compute_dtype)
    for i, (w, b) in enumerate(params):
        h = jnp.dot(h, w.astype(compute_dtype),
                    preferred_element_type=jnp.float32) + b
        if i < len(params) - 1:
            h = jnp.maximum(h, 0.0).astype(compute_dtype)
    return h


# ----------------------------------------------------------------------------
# Demo / self-test
# ----------------------------------------------------------------------------
if __name__ == "__main__":
    key = jax.random.PRNGKey(0)
    kp, kx1, kx2 = jax.random.split(key, 3)

    params = init_params(kp)

    # --- f32 compute path: validates exact torch semantics ------------------
    x_img = jax.random.normal(kx1, (8, 1, 28, 28), dtype=jnp.float32)  # NCHW
    params_f32 = prepare_params(params, jnp.float32)
    out_f32 = jax.block_until_ready(mlp_forward(x_img, params_f32))
    ref_f32 = mlp_reference_f32(x_img, params)
    assert out_f32.shape == (8, 10), out_f32.shape
    assert jnp.allclose(out_f32, ref_f32, atol=1e-3, rtol=1e-3), \
        float(jnp.max(jnp.abs(out_f32 - ref_f32)))

    # --- bf16 perf path: default tile (clamped), single ragged tile ---------
    x_big = jax.random.normal(kx2, (300, 784), dtype=jnp.float32)  # B % 8 != 0? no, ragged vs tb
    params_bf16 = prepare_params(params, jnp.bfloat16)
    out_bf16 = jax.block_until_ready(mlp_forward(x_big, params_bf16))
    ref_bf16 = mlp_reference_matched(x_big, params, jnp.bfloat16)
    assert out_bf16.shape == (300, 10), out_bf16.shape
    assert jnp.allclose(out_bf16, ref_bf16, atol=2e-2, rtol=2e-2), \
        float(jnp.max(jnp.abs(out_bf16 - ref_bf16)))

    # --- bf16 perf path: multi-tile grid + ragged last tile (300 = 2*128+44) -
    out_tiled = jax.block_until_ready(mlp_forward(x_big, params_bf16, tb=128))
    assert out_tiled.shape == (300, 10), out_tiled.shape
    assert jnp.allclose(out_tiled, ref_bf16, atol=2e-2, rtol=2e-2), \
        float(jnp.max(jnp.abs(out_tiled - ref_bf16)))

    print("KERNEL_OK")
</pallas_src>

<mosaic_0001>
module attributes {stable_mosaic.version = 11 : i64} {
  func.func @mlp_kernel(%arg0: i32, %arg1: memref<8x784xf32, #tpu.memory_space<vmem>>, %arg2: memref<784x512xf32, #tpu.memory_space<vmem>>, %arg3: memref<1x512xf32, #tpu.memory_space<vmem>>, %arg4: memref<512x256xf32, #tpu.memory_space<vmem>>, %arg5: memref<1x256xf32, #tpu.memory_space<vmem>>, %arg6: memref<256x128xf32, #tpu.memory_space<vmem>>, %arg7: memref<1x128xf32, #tpu.memory_space<vmem>>, %arg8: memref<128x128xf32, #tpu.memory_space<vmem>>, %arg9: memref<1x128xf32, #tpu.memory_space<vmem>>, %arg10: memref<128x128xf32, #tpu.memory_space<vmem>>, %arg11: memref<1x128xf32, #tpu.memory_space<vmem>>, %arg12: memref<8x128xf32, #tpu.memory_space<vmem>>) attributes {dimension_semantics = [#tpu.dimension_semantics<parallel>], iteration_bounds = array<i64: 1>, scalar_prefetch = 0 : i64, scratch_operands = 0 : i64, tpu.core_type = #tpu.core_type<tc>, window_params = [{transform_indices = @transform_0, window_bounds = array<i64: 8, 784>}, {pipeline_mode = #tpu.pipeline_mode<synchronous>, transform_indices = @transform_1, window_bounds = array<i64: 784, 512>}, {pipeline_mode = #tpu.pipeline_mode<synchronous>, transform_indices = @transform_2, window_bounds = array<i64: 1, 512>}, {pipeline_mode = #tpu.pipeline_mode<synchronous>, transform_indices = @transform_3, window_bounds = array<i64: 512, 256>}, {pipeline_mode = #tpu.pipeline_mode<synchronous>, transform_indices = @transform_4, window_bounds = array<i64: 1, 256>}, {pipeline_mode = #tpu.pipeline_mode<synchronous>, transform_indices = @transform_5, window_bounds = array<i64: 256, 128>}, {pipeline_mode = #tpu.pipeline_mode<synchronous>, transform_indices = @transform_6, window_bounds = array<i64: 1, 128>}, {pipeline_mode = #tpu.pipeline_mode<synchronous>, transform_indices = @transform_7, window_bounds = array<i64: 128, 128>}, {pipeline_mode = #tpu.pipeline_mode<synchronous>, transform_indices = @transform_8, window_bounds = array<i64: 1, 128>}, {pipeline_mode = #tpu.pipeline_mode<synchronous>, transform_indices = @transform_9, window_bounds = array<i64: 128, 128>}, {pipeline_mode = #tpu.pipeline_mode<synchronous>, transform_indices = @transform_10, window_bounds = array<i64: 1, 128>}, {transform_indices = @transform_11, window_bounds = array<i64: 8, 128>}]} {
    %c0 = arith.constant 0 : index
    %c0_0 = arith.constant 0 : index
    %0 = vector.load %arg1[%c0, %c0_0] : memref<8x784xf32, #tpu.memory_space<vmem>>, vector<8x784xf32>
    %c0_1 = arith.constant 0 : index
    %c0_2 = arith.constant 0 : index
    %1 = vector.load %arg2[%c0_1, %c0_2] : memref<784x512xf32, #tpu.memory_space<vmem>>, vector<784x512xf32>
    %cst = arith.constant dense<0.000000e+00> : vector<8x512xf32>
    %2 = tpu.matmul %0, %1, %cst {dimension_numbers = #tpu.dot_dimension_numbers<[1], [0], [0], [1], [0, 0, 1, 1], [], []>} : vector<8x784xf32>, vector<784x512xf32>, vector<8x512xf32> -> vector<8x512xf32>
    %c0_3 = arith.constant 0 : index
    %c0_4 = arith.constant 0 : index
    %3 = vector.load %arg3[%c0_3, %c0_4] : memref<1x512xf32, #tpu.memory_space<vmem>>, vector<1x512xf32>
    %4 = vector.broadcast %3 : vector<1x512xf32> to vector<8x512xf32>
    %5 = arith.addf %2, %4 : vector<8x512xf32>
    %cst_5 = arith.constant 0.000000e+00 : f32
    %6 = vector.broadcast %cst_5 : f32 to vector<8x512xf32>
    %7 = arith.maximumf %5, %6 : vector<8x512xf32>
    %c0_6 = arith.constant 0 : index
    %c0_7 = arith.constant 0 : index
    %8 = vector.load %arg4[%c0_6, %c0_7] : memref<512x256xf32, #tpu.memory_space<vmem>>, vector<512x256xf32>
    %cst_8 = arith.constant dense<0.000000e+00> : vector<8x256xf32>
    %9 = tpu.matmul %7, %8, %cst_8 {dimension_numbers = #tpu.dot_dimension_numbers<[1], [0], [0], [1], [0, 0, 1, 1], [], []>} : vector<8x512xf32>, vector<512x256xf32>, vector<8x256xf32> -> vector<8x256xf32>
    %c0_9 = arith.constant 0 : index
    %c0_10 = arith.constant 0 : index
    %10 = vector.load %arg5[%c0_9, %c0_10] : memref<1x256xf32, #tpu.memory_space<vmem>>, vector<1x256xf32>
    %11 = vector.broadcast %10 : vector<1x256xf32> to vector<8x256xf32>
    %12 = arith.addf %9, %11 : vector<8x256xf32>
    %cst_11 = arith.constant 0.000000e+00 : f32
    %13 = vector.broadcast %cst_11 : f32 to vector<8x256xf32>
    %14 = arith.maximumf %12, %13 : vector<8x256xf32>
    %c0_12 = arith.constant 0 : index
    %c0_13 = arith.constant 0 : index
    %15 = vector.load %arg6[%c0_12, %c0_13] : memref<256x128xf32, #tpu.memory_space<vmem>>, vector<256x128xf32>
    %cst_14 = arith.constant dense<0.000000e+00> : vector<8x128xf32>
    %16 = tpu.matmul %14, %15, %cst_14 {dimension_numbers = #tpu.dot_dimension_numbers<[1], [0], [0], [1], [0, 0, 1, 1], [], []>} : vector<8x256xf32>, vector<256x128xf32>, vector<8x128xf32> -> vector<8x128xf32>
    %c0_15 = arith.constant 0 : index
    %c0_16 = arith.constant 0 : index
    %17 = vector.load %arg7[%c0_15, %c0_16] : memref<1x128xf32, #tpu.memory_space<vmem>>, vector<1x128xf32>
    %18 = vector.broadcast %17 : vector<1x128xf32> to vector<8x128xf32>
    %19 = arith.addf %16, %18 : vector<8x128xf32>
    %cst_17 = arith.constant 0.000000e+00 : f32
    %20 = vector.broadcast %cst_17 : f32 to vector<8x128xf32>
    %21 = arith.maximumf %19, %20 : vector<8x128xf32>
    %c0_18 = arith.constant 0 : index
    %c0_19 = arith.constant 0 : index
    %22 = vector.load %arg8[%c0_18, %c0_19] : memref<128x128xf32, #tpu.memory_space<vmem>>, vector<128x128xf32>
    %cst_20 = arith.constant dense<0.000000e+00> : vector<8x128xf32>
    %23 = tpu.matmul %21, %22, %cst_20 {dimension_numbers = #tpu.dot_dimension_numbers<[1], [0], [0], [1], [0, 0, 1, 1], [], []>} : vector<8x128xf32>, vector<128x128xf32>, vector<8x128xf32> -> vector<8x128xf32>
    %c0_21 = arith.constant 0 : index
    %c0_22 = arith.constant 0 : index
    %24 = vector.load %arg9[%c0_21, %c0_22] : memref<1x128xf32, #tpu.memory_space<vmem>>, vector<1x128xf32>
    %25 = vector.broadcast %24 : vector<1x128xf32> to vector<8x128xf32>
    %26 = arith.addf %23, %25 : vector<8x128xf32>
    %cst_23 = arith.constant 0.000000e+00 : f32
    %27 = vector.broadcast %cst_23 : f32 to vector<8x128xf32>
    %28 = arith.maximumf %26, %27 : vector<8x128xf32>
    %c0_24 = arith.constant 0 : index
    %c0_25 = arith.constant 0 : index
    %29 = vector.load %arg10[%c0_24, %c0_25] : memref<128x128xf32, #tpu.memory_space<vmem>>, vector<128x128xf32>
    %cst_26 = arith.constant dense<0.000000e+00> : vector<8x128xf32>
    %30 = tpu.matmul %28, %29, %cst_26 {dimension_numbers = #tpu.dot_dimension_numbers<[1], [0], [0], [1], [0, 0, 1, 1], [], []>} : vector<8x128xf32>, vector<128x128xf32>, vector<8x128xf32> -> vector<8x128xf32>
    %c0_27 = arith.constant 0 : index
    %c0_28 = arith.constant 0 : index
    %31 = vector.load %arg11[%c0_27, %c0_28] : memref<1x128xf32, #tpu.memory_space<vmem>>, vector<1x128xf32>
    %32 = vector.broadcast %31 : vector<1x128xf32> to vector<8x128xf32>
    %33 = arith.addf %30, %32 : vector<8x128xf32>
    %c0_29 = arith.constant 0 : index
    %c0_30 = arith.constant 0 : index
    %34 = vector.load %arg12[%c0_29, %c0_30] : memref<8x128xf32, #tpu.memory_space<vmem>>, vector<8x128xf32>
    tpu.vector_store %arg12[%c0_29, %c0_30], %33 {strides = array<i32>} : memref<8x128xf32, #tpu.memory_space<vmem>>, vector<8x128xf32>,
    return
  }
  func.func @transform_0(%arg0: i32) -> (i32, i32) {
    %c0_i32 = arith.constant 0 : i32
    %c0_i32_0 = arith.constant 0 : i32
    return %arg0, %c0_i32 : i32, i32
  }
  func.func @transform_1(%arg0: i32) -> (i32, i32) {
    %c0_i32 = arith.constant 0 : i32
    %c0_i32_0 = arith.constant 0 : i32
    %c0_i32_1 = arith.constant 0 : i32
    return %c0_i32, %c0_i32_0 : i32, i32
  }
  func.func @transform_2(%arg0: i32) -> (i32, i32) {
    %c0_i32 = arith.constant 0 : i32
    %c0_i32_0 = arith.constant 0 : i32
    %c0_i32_1 = arith.constant 0 : i32
    return %c0_i32, %c0_i32_0 : i32, i32
  }
  func.func @transform_3(%arg0: i32) -> (i32, i32) {
    %c0_i32 = arith.constant 0 : i32
    %c0_i32_0 = arith.constant 0 : i32
    %c0_i32_1 = arith.constant 0 : i32
    return %c0_i32, %c0_i32_0 : i32, i32
  }
  func.func @transform_4(%arg0: i32) -> (i32, i32) {
    %c0_i32 = arith.constant 0 : i32
    %c0_i32_0 = arith.constant 0 : i32
    %c0_i32_1 = arith.constant 0 : i32
    return %c0_i32, %c0_i32_0 : i32, i32
  }
  func.func @transform_5(%arg0: i32) -> (i32, i32) {
    %c0_i32 = arith.constant 0 : i32
    %c0_i32_0 = arith.constant 0 : i32
    %c0_i32_1 = arith.constant 0 : i32
    return %c0_i32, %c0_i32_0 : i32, i32
  }
  func.func @transform_6(%arg0: i32) -> (i32, i32) {
    %c0_i32 = arith.constant 0 : i32
    %c0_i32_0 = arith.constant 0 : i32
    %c0_i32_1 = arith.constant 0 : i32
    return %c0_i32, %c0_i32_0 : i32, i32
  }
  func.func @transform_7(%arg0: i32) -> (i32, i32) {
    %c0_i32 = arith.constant 0 : i32
    %c0_i32_0 = arith.constant 0 : i32
    %c0_i32_1 = arith.constant 0 : i32
    return %c0_i32, %c0_i32_0 : i32, i32
  }
  func.func @transform_8(%arg0: i32) -> (i32, i32) {
    %c0_i32 = arith.constant 0 : i32
    %c0_i32_0 = arith.constant 0 : i32
    %c0_i32_1 = arith.constant 0 : i32
    return %c0_i32, %c0_i32_0 : i32, i32
  }
  func.func @transform_9(%arg0: i32) -> (i32, i32) {
    %c0_i32 = arith.constant 0 : i32
    %c0_i32_0 = arith.constant 0 : i32
    %c0_i32_1 = arith.constant 0 : i32
    return %c0_i32, %c0_i32_0 : i32, i32
  }
  func.func @transform_10(%arg0: i32) -> (i32, i32) {
    %c0_i32 = arith.constant 0 : i32
    %c0_i32_0 = arith.constant 0 : i32
    %c0_i32_1 = arith.constant 0 : i32
    return %c0_i32, %c0_i32_0 : i32, i32
  }
  func.func @transform_11(%arg0: i32) -> (i32, i32) {
    %c0_i32 = arith.constant 0 : i32
    %c0_i32_0 = arith.constant 0 : i32
    return %arg0, %c0_i32 : i32, i32
  }
}

</mosaic_0001>

<llo_original>
// kernel: tpu_custom_call.1
$region0: #{tpu_custom_call.1}
  #allocation0 [shape = 'u32[]', space=smem, size = 0x4, offset = 0x4, fixed_abs, tag = 'smem constant byte address 0x4 - core index']
  #allocation1 [shape = 'u32[144,128]{1,0:T(1,128)}', space=vmem, size = 0x12000, scoped, tag = 'internal scratch']
  %s0 = inlined_call_operand.hbm [shape: f32[8,784], index: 0, kind: input, shape index: {}]
  %s1 = inlined_call_operand.hbm [shape: f32[784,512], index: 1, kind: input, shape index: {}]
  %s2 = inlined_call_operand.hbm [shape: f32[1,512], index: 2, kind: input, shape index: {}]
  %s3 = inlined_call_operand.hbm [shape: f32[512,256], index: 3, kind: input, shape index: {}]
  %s4 = inlined_call_operand.hbm [shape: f32[1,256], index: 4, kind: input, shape index: {}]
  %s5 = inlined_call_operand.hbm [shape: f32[256,128], index: 5, kind: input, shape index: {}]
  %s6 = inlined_call_operand.hbm [shape: f32[1,128], index: 6, kind: input, shape index: {}]
  %s7 = inlined_call_operand.hbm [shape: f32[128,128], index: 7, kind: input, shape index: {}]
  %s8 = inlined_call_operand.hbm [shape: f32[1,128], index: 8, kind: input, shape index: {}]
  %s9 = inlined_call_operand.hbm [shape: f32[128,128], index: 9, kind: input, shape index: {}]
  %s10 = inlined_call_operand.hbm [shape: f32[1,128], index: 10, kind: input, shape index: {}]
  %s11 = inlined_call_operand.hbm [shape: f32[8,128], index: 11, kind: output, shape index: {}]
  %s12 = sld [smem:[#allocation0]]
  $region98: #{tpu_custom_call.1} parent=0
    _
  %s14 = ssub.s32 1, %s12
  %s15 = scalar_select 0, %s14, %s12
  $region1: #{tpu_custom_call.1} parent=0
    #allocation2 [shape = 'u8[28672]{0}', space=vmem, size = 0x7000, scoped, tag = 'input window, operand 0, single buffered']
    #allocation3 [shape = 's32[1]{0}', space=sflag, size = 0x4, scoped, tag = 'scoped memory for tpu_custom_call.1']
    #allocation4 [shape = 's32[1]{0}', space=sflag, size = 0x4, scoped, tag = 'scoped memory for tpu_custom_call.1']
    #allocation5 [shape = 'u8[1605632]{0}', space=vmem, size = 0x188000, scoped, tag = 'input window, operand 1, single buffered']
    #allocation6 [shape = 's32[1]{0}', space=sflag, size = 0x4, scoped, tag = 'scoped memory for tpu_custom_call.1']
    #allocation7 [shape = 'u8[2048]{0}', space=vmem, size = 0x800, scoped, tag = 'input window, operand 2, single buffered']
    #allocation8 [shape = 'u8[524288]{0}', space=vmem, size = 0x80000, scoped, tag = 'input window, operand 3, single buffered']
    #allocation9 [shape = 's32[1]{0}', space=sflag, size = 0x4, scoped, tag = 'scoped memory for tpu_custom_call.1']
    #allocation10 [shape = 'u8[1024]{0}', space=vmem, size = 0x400, scoped, tag = 'input window, operand 4, single buffered']
    #allocation11 [shape = 'u8[131072]{0}', space=vmem, size = 0x20000, scoped, tag = 'input window, operand 5, single buffered']
    #allocation12 [shape = 's32[1]{0}', space=sflag, size = 0x4, scoped, tag = 'scoped memory for tpu_custom_call.1']
    #allocation13 [shape = 'u8[512]{0}', space=vmem, size = 0x400, scoped, tag = 'input window, operand 6, single buffered']
    #allocation14 [shape = 'u8[65536]{0}', space=vmem, size = 0x10000, scoped, tag = 'input window, operand 7, single buffered']
    #allocation15 [shape = 's32[1]{0}', space=sflag, size = 0x4, scoped, tag = 'scoped memory for tpu_custom_call.1']
    #allocation16 [shape = 'u8[512]{0}', space=vmem, size = 0x400, scoped, tag = 'input window, operand 8, single buffered']
    #allocation17 [shape = 'u8[65536]{0}', space=vmem, size = 0x10000, scoped, tag = 'input window, operand 9, single buffered']
    #allocation18 [shape = 's32[1]{0}', space=sflag, size = 0x4, scoped, tag = 'scoped memory for tpu_custom_call.1']
    #allocation19 [shape = 'u8[512]{0}', space=vmem, size = 0x400, scoped, tag = 'input window, operand 10, single buffered']
    #allocation20 [shape = 'u8[4096]{0}', space=vmem, size = 0x1000, scoped, tag = 'output window, operand 0, single buffered']
    %16 = vsyncpa [#allocation3], 0
    %17 = vsyncpa [#allocation6], 0
    %18 = vsyncpa [#allocation9], 0
    %19 = vsyncpa [#allocation12], 0
    %20 = vsyncpa [#allocation15], 0
    %21 = vsyncpa [#allocation18], 0
    %22 = vsyncpa [#allocation4], 0
    // Predicated region
    $region2: #{tpu_custom_call.1} parent=1 // pred_check
      _
    $region3: #{tpu_custom_call.1} parent=1 // pred_check_branch
      %24 = sbr.rel (0) target = $region5
    $region4: #{tpu_custom_call.1} parent=1 // pred_region
      %s26 = ssub.s32 896, 896
      %27 = vsyncadd [#allocation3], %s26
      %s29 = sshll.u32 [#allocation2], 4
      %s30 = int_to_ptr.vmem [resolvable:$true] %s29
      %32 = dma.hbm_to_vmem [thread:$0]  %s0, 896, %s30, [#allocation3]
    $region5: #{tpu_custom_call.1} parent=1 // pred_fallthru
      _
    // Predicated region
    $region6: #{tpu_custom_call.1} parent=1 // pred_check
      _
    $region7: #{tpu_custom_call.1} parent=1 // pred_check_branch
      %34 = sbr.rel (0) target = $region9
    $region8: #{tpu_custom_call.1} parent=1 // pred_region
      %s36 = ssub.s32 50176, 50176
      %37 = vsyncadd [#allocation6], %s36
      %s38 = sshll.u32 [#allocation5], 4
      %s39 = int_to_ptr.vmem [resolvable:$true] %s38
      %44 = dma.hbm_to_vmem [thread:$0]  %s1, 50176, %s39, [#allocation6], 512, 512, 32
    $region9: #{tpu_custom_call.1} parent=1 // pred_fallthru
      _
    // Predicated region
    $region10: #{tpu_custom_call.1} parent=1 // pred_check
      _
    $region11: #{tpu_custom_call.1} parent=1 // pred_check_branch
      %46 = sbr.rel (0) target = $region13
    $region12: #{tpu_custom_call.1} parent=1 // pred_region
      %s48 = ssub.s32 64, 64
      %49 = vsyncadd [#allocation6], %s48
      %s51 = sshll.u32 [#allocation7], 4
      %s52 = int_to_ptr.vmem [resolvable:$true] %s51
      %54 = dma.hbm_to_vmem [thread:$0]  %s2, 64, %s52, [#allocation6]
    $region13: #{tpu_custom_call.1} parent=1 // pred_fallthru
      _
    // Predicated region
    $region14: #{tpu_custom_call.1} parent=1 // pred_check
      _
    $region15: #{tpu_custom_call.1} parent=1 // pred_check_branch
      %56 = sbr.rel (0) target = $region17
    $region16: #{tpu_custom_call.1} parent=1 // pred_region
      %s58 = ssub.s32 16384, 16384
      %59 = vsyncadd [#allocation9], %s58
      %s60 = sshll.u32 [#allocation8], 4
      %s61 = int_to_ptr.vmem [resolvable:$true] %s60
      %66 = dma.hbm_to_vmem [thread:$0]  %s3, 16384, %s61, [#allocation9], 256, 256, 16
    $region17: #{tpu_custom_call.1} parent=1 // pred_fallthru
      _
    // Predicated region
    $region18: #{tpu_custom_call.1} parent=1 // pred_check
      _
    $region19: #{tpu_custom_call.1} parent=1 // pred_check_branch
      %68 = sbr.rel (0) target = $region21
    $region20: #{tpu_custom_call.1} parent=1 // pred_region
      %s70 = ssub.s32 32, 32
      %71 = vsyncadd [#allocation9], %s70
      %s73 = sshll.u32 [#allocation10], 4
      %s74 = int_to_ptr.vmem [resolvable:$true] %s73
      %76 = dma.hbm_to_vmem [thread:$0]  %s4, 32, %s74, [#allocation9]
    $region21: #{tpu_custom_call.1} parent=1 // pred_fallthru
      _
    // Predicated region
    $region22: #{tpu_custom_call.1} parent=1 // pred_check
      _
    $region23: #{tpu_custom_call.1} parent=1 // pred_check_branch
      %78 = sbr.rel (0) target = $region25
    $region24: #{tpu_custom_call.1} parent=1 // pred_region
      %s80 = ssub.s32 4096, 4096
      %81 = vsyncadd [#allocation12], %s80
      %s82 = sshll.u32 [#allocation11], 4
      %s83 = int_to_ptr.vmem [resolvable:$true] %s82
      %88 = dma.hbm_to_vmem [thread:$0]  %s5, 4096, %s83, [#allocation12], 128, 128, 8
    $region25: #{tpu_custom_call.1} parent=1 // pred_fallthru
      _
    // Predicated region
    $region26: #{tpu_custom_call.1} parent=1 // pred_check
      _
    $region27: #{tpu_custom_call.1} parent=1 // pred_check_branch
      %90 = sbr.rel (0) target = $region29
    $region28: #{tpu_custom_call.1} parent=1 // pred_region
      %s92 = ssub.s32 16, 16
      %93 = vsyncadd [#allocation12], %s92
      %s95 = sshll.u32 [#allocation13], 4
      %s96 = int_to_ptr.vmem [resolvable:$true] %s95
      %98 = dma.hbm_to_vmem [thread:$0]  %s6, 16, %s96, [#allocation12]
    $region29: #{tpu_custom_call.1} parent=1 // pred_fallthru
      _
    // Predicated region
    $region30: #{tpu_custom_call.1} parent=1 // pred_check
      _
    $region31: #{tpu_custom_call.1} parent=1 // pred_check_branch
      %100 = sbr.rel (0) target = $region33
    $region32: #{tpu_custom_call.1} parent=1 // pred_region
      %s102 = ssub.s32 2048, 2048
      %103 = vsyncadd [#allocation15], %s102
      %s104 = sshll.u32 [#allocation14], 4
      %s105 = int_to_ptr.vmem [resolvable:$true] %s104
      %110 = dma.hbm_to_vmem [thread:$0]  %s7, 2048, %s105, [#allocation15], 128, 128, 8
    $region33: #{tpu_custom_call.1} parent=1 // pred_fallthru
      _
    // Predicated region
    $region34: #{tpu_custom_call.1} parent=1 // pred_check
      _
    $region35: #{tpu_custom_call.1} parent=1 // pred_check_branch
      %112 = sbr.rel (0) target = $region37
    $region36: #{tpu_custom_call.1} parent=1 // pred_region
      %s114 = ssub.s32 16, 16
      %115 = vsyncadd [#allocation15], %s114
      %s117 = sshll.u32 [#allocation16], 4
      %s118 = int_to_ptr.vmem [resolvable:$true] %s117
      %120 = dma.hbm_to_vmem [thread:$0]  %s8, 16, %s118, [#allocation15]
    $region37: #{tpu_custom_call.1} parent=1 // pred_fallthru
      _
    // Predicated region
    $region38: #{tpu_custom_call.1} parent=1 // pred_check
      _
    $region39: #{tpu_custom_call.1} parent=1 // pred_check_branch
      %122 = sbr.rel (0) target = $region41
    $region40: #{tpu_custom_call.1} parent=1 // pred_region
      %s124 = ssub.s32 2048, 2048
      %125 = vsyncadd [#allocation18], %s124
      %s126 = sshll.u32 [#allocation17], 4
      %s127 = int_to_ptr.vmem [resolvable:$true] %s126
      %132 = dma.hbm_to_vmem [thread:$0]  %s9, 2048, %s127, [#allocation18], 128, 128, 8
    $region41: #{tpu_custom_call.1} parent=1 // pred_fallthru
      _
    // Predicated region
    $region42: #{tpu_custom_call.1} parent=1 // pred_check
      _
    $region43: #{tpu_custom_call.1} parent=1 // pred_check_branch
      %134 = sbr.rel (0) target = $region45
    $region44: #{tpu_custom_call.1} parent=1 // pred_region
      %s136 = ssub.s32 16, 16
      %137 = vsyncadd [#allocation18], %s136
      %s139 = sshll.u32 [#allocation19], 4
      %s140 = int_to_ptr.vmem [resolvable:$true] %s139
      %142 = dma.hbm_to_vmem [thread:$0]  %s10, 16, %s140, [#allocation18]
    $region45: #{tpu_custom_call.1} parent=1 // pred_fallthru
      _
    // Predicated region
    $region46: #{tpu_custom_call.1} parent=1 // pred_check
      _
    $region47: #{tpu_custom_call.1} parent=1 // pred_check_branch
      %144 = sbr.rel (0) target = $region49
    $region48: #{tpu_custom_call.1} parent=1 // pred_region
      %145 = dma.done [#allocation3], 896
    $region49: #{tpu_custom_call.1} parent=1 // pred_fallthru
      _
    // Predicated region
    $region50: #{tpu_custom_call.1} parent=1 // pred_check
      _
    $region51: #{tpu_custom_call.1} parent=1 // pred_check_branch
      %147 = sbr.rel (0) target = $region53
    $region52: #{tpu_custom_call.1} parent=1 // pred_region
      %148 = dma.done [#allocation6], 50176
    $region53: #{tpu_custom_call.1} parent=1 // pred_fallthru
      _
    // Predicated region
    $region54: #{tpu_custom_call.1} parent=1 // pred_check
      _
    $region55: #{tpu_custom_call.1} parent=1 // pred_check_branch
      %150 = sbr.rel (0) target = $region57
    $region56: #{tpu_custom_call.1} parent=1 // pred_region
      %151 = dma.done [#allocation6], 64
    $region57: #{tpu_custom_call.1} parent=1 // pred_fallthru
      _
    // Predicated region
    $region58: #{tpu_custom_call.1} parent=1 // pred_check
      _
    $region59: #{tpu_custom_call.1} parent=1 // pred_check_branch
      %153 = sbr.rel (0) target = $region61
    $region60: #{tpu_custom_call.1} parent=1 // pred_region
      %154 = dma.done [#allocation9], 16384
    $region61: #{tpu_custom_call.1} parent=1 // pred_fallthru
      _
    // Predicated region
    $region62: #{tpu_custom_call.1} parent=1 // pred_check
      _
    $region63: #{tpu_custom_call.1} parent=1 // pred_check_branch
      %156 = sbr.rel (0) target = $region65
    $region64: #{tpu_custom_call.1} parent=1 // pred_region
      %157 = dma.done [#allocation9], 32
    $region65: #{tpu_custom_call.1} parent=1 // pred_fallthru
      _
    // Predicated region
    $region66: #{tpu_custom_call.1} parent=1 // pred_check
      _
    $region67: #{tpu_custom_call.1} parent=1 // pred_check_branch
      %159 = sbr.rel (0) target = $region69
    $region68: #{tpu_custom_call.1} parent=1 // pred_region
      %160 = dma.done [#allocation12], 4096
    $region69: #{tpu_custom_call.1} parent=1 // pred_fallthru
      _
    // Predicated region
    $region70: #{tpu_custom_call.1} parent=1 // pred_check
      _
    $region71: #{tpu_custom_call.1} parent=1 // pred_check_branch
      %162 = sbr.rel (0) target = $region73
    $region72: #{tpu_custom_call.1} parent=1 // pred_region
      %163 = dma.done [#allocation12], 16
    $region73: #{tpu_custom_call.1} parent=1 // pred_fallthru
      _
    // Predicated region
    $region74: #{tpu_custom_call.1} parent=1 // pred_check
      _
    $region75: #{tpu_custom_call.1} parent=1 // pred_check_branch
      %165 = sbr.rel (0) target = $region77
    $region76: #{tpu_custom_call.1} parent=1 // pred_region
      %166 = dma.done [#allocation15], 2048
    $region77: #{tpu_custom_call.1} parent=1 // pred_fallthru
      _
    // Predicated region
    $region78: #{tpu_custom_call.1} parent=1 // pred_check
      _
    $region79: #{tpu_custom_call.1} parent=1 // pred_check_branch
      %168 = sbr.rel (0) target = $region81
    $region80: #{tpu_custom_call.1} parent=1 // pred_region
      %169 = dma.done [#allocation15], 16
    $region81: #{tpu_custom_call.1} parent=1 // pred_fallthru
      _
    // Predicated region
    $region82: #{tpu_custom_call.1} parent=1 // pred_check
      _
    $region83: #{tpu_custom_call.1} parent=1 // pred_check_branch
      %171 = sbr.rel (0) target = $region85
    $region84: #{tpu_custom_call.1} parent=1 // pred_region
      %172 = dma.done [#allocation18], 2048
    $region85: #{tpu_custom_call.1} parent=1 // pred_fallthru
      _
    // Predicated region
    $region86: #{tpu_custom_call.1} parent=1 // pred_check
      _
    $region87: #{tpu_custom_call.1} parent=1 // pred_check_branch
      %174 = sbr.rel (0) target = $region89
    $region88: #{tpu_custom_call.1} parent=1 // pred_region
      %175 = dma.done [#allocation18], 16
    $region89: #{tpu_custom_call.1} parent=1 // pred_fallthru
      _
    %v176 = vld [vmem:[#allocation2] sm:$0xff]
    %v177 = vld [vmem:[#allocation2 + $0x8] sm:$0xff]
    %v178 = vld [vmem:[#allocation2 + $0x10] sm:$0xff]
    %v179 = vld [vmem:[#allocation2 + $0x18] sm:$0xff]
    %v180 = vld [vmem:[#allocation2 + $0x20] sm:$0xff]
    %v181 = vld [vmem:[#allocation2 + $0x28] sm:$0xff]
    %v182 = vld [vmem:[#allocation2 + $0x30] sm:$0xff]
    %v183 = vld [vmem:[#allocation5] sm:$0xff]
    %v184 = vld [vmem:[#allocation5 + $0x8] sm:$0xff]
    %v185 = vld [vmem:[#allocation5 + $0x10] sm:$0xff]
    %v186 = vld [vmem:[#allocation5 + $0x18] sm:$0xff]
    %v187 = vld [vmem:[#allocation5 + $0x20] sm:$0xff]
    %v188 = vld [vmem:[#allocation5 + $0x28] sm:$0xff]
    %v189 = vld [vmem:[#allocation5 + $0x30] sm:$0xff]
    %v190 = vld [vmem:[#allocation5 + $0x38] sm:$0xff]
    %v191 = vld [vmem:[#allocation5 + $0x40] sm:$0xff]
    %v192 = vld [vmem:[#allocation5 + $0x48] sm:$0xff]
    %v193 = vld [vmem:[#allocation5 + $0x50] sm:$0xff]
    %v194 = vld [vmem:[#allocation5 + $0x58] sm:$0xff]
    %v195 = vld [vmem:[#allocation5 + $0x60] sm:$0xff]
    %v196 = vld [vmem:[#allocation5 + $0x68] sm:$0xff]
    %v197 = vld [vmem:[#allocation5 + $0x70] sm:$0xff]
    %v198 = vld [vmem:[#allocation5 + $0x78] sm:$0xff]
    %v199 = vld [vmem:[#allocation5 + $0x80] sm:$0xff]
    %v200 = vld [vmem:[#allocation5 + $0x88] sm:$0xff]
    %v201 = vld [vmem:[#allocation5 + $0x90] sm:$0xff]
    %v202 = vld [vmem:[#allocation5 + $0x98] sm:$0xff]
    %v203 = vld [vmem:[#allocation5 + $0xa0] sm:$0xff]
    %v204 = vld [vmem:[#allocation5 + $0xa8] sm:$0xff]
    %v205 = vld [vmem:[#allocation5 + $0xb0] sm:$0xff]
    %v206 = vld [vmem:[#allocation5 + $0xb8] sm:$0xff]
    %v207 = vld [vmem:[#allocation5 + $0xc0] sm:$0xff]
    %v208 = vld [vmem:[#allocation5 + $0xc8] sm:$0xff]
    %v209 = vld [vmem:[#allocation5 + $0xd0] sm:$0xff]
    %v210 = vld [vmem:[#allocation5 + $0xd8] sm:$0xff]
    %v211 = vld [vmem:[#allocation5 + $0xe0] sm:$0xff]
    %v212 = vld [vmem:[#allocation5 + $0xe8] sm:$0xff]
    %v213 = vld [vmem:[#allocation5 + $0xf0] sm:$0xff]
    %v214 = vld [vmem:[#allocation5 + $0xf8] sm:$0xff]
    %v215 = vld [vmem:[#allocation5 + $0x100] sm:$0xff]
    %v216 = vld [vmem:[#allocation5 + $0x108] sm:$0xff]
    %v217 = vld [vmem:[#allocation5 + $0x110] sm:$0xff]
    %v218 = vld [vmem:[#allocation5 + $0x118] sm:$0xff]
    %v219 = vld [vmem:[#allocation5 + $0x120] sm:$0xff]
    %v220 = vld [vmem:[#allocation5 + $0x128] sm:$0xff]
    %v221 = vld [vmem:[#allocation5 + $0x130] sm:$0xff]
    %v222 = vld [vmem:[#allocation5 + $0x138] sm:$0xff]
    %v223 = vld [vmem:[#allocation5 + $0x140] sm:$0xff]
    %v224 = vld [vmem:[#allocation5 + $0x148] sm:$0xff]
    %v225 = vld [vmem:[#allocation5 + $0x150] sm:$0xff]
    %v226 = vld [vmem:[#allocation5 + $0x158] sm:$0xff]
    %v227 = vld [vmem:[#allocation5 + $0x160] sm:$0xff]
    %v228 = vld [vmem:[#allocation5 + $0x168] sm:$0xff]
    %v229 = vld [vmem:[#allocation5 + $0x170] sm:$0xff]
    %v230 = vld [vmem:[#allocation5 + $0x178] sm:$0xff]
    %v231 = vld [vmem:[#allocation5 + $0x180] sm:$0xff]
    %v232 = vld [vmem:[#allocation5 + $0x188] sm:$0xff]
    %v233 = vld [vmem:[#allocation5 + $0x190] sm:$0xff]
    %v234 = vld [vmem:[#allocation5 + $0x198] sm:$0xff]
    %v235 = vld [vmem:[#allocation5 + $0x1a0] sm:$0xff]
    %v236 = vld [vmem:[#allocation5 + $0x1a8] sm:$0xff]
    %v237 = vld [vmem:[#allocation5 + $0x1b0] sm:$0xff]
    %v238 = vld [vmem:[#allocation5 + $0x1b8] sm:$0xff]
    %v239 = vld [vmem:[#allocation5 + $0x1c0] sm:$0xff]
    %v240 = vld [vmem:[#allocation5 + $0x1c8] sm:$0xff]
    %v241 = vld [vmem:[#allocation5 + $0x1d0] sm:$0xff]
    %v242 = vld [vmem:[#allocation5 + $0x1d8] sm:$0xff]
    %v243 = vld [vmem:[#allocation5 + $0x1e0] sm:$0xff]
    %v244 = vld [vmem:[#allocation5 + $0x1e8] sm:$0xff]
    %v245 = vld [vmem:[#allocation5 + $0x1f0] sm:$0xff]
    %v246 = vld [vmem:[#allocation5 + $0x1f8] sm:$0xff]
    %v247 = vld [vmem:[#allocation5 + $0x200] sm:$0xff]
    %v248 = vld [vmem:[#allocation5 + $0x208] sm:$0xff]
    %v249 = vld [vmem:[#allocation5 + $0x210] sm:$0xff]
    %v250 = vld [vmem:[#allocation5 + $0x218] sm:$0xff]
    %v251 = vld [vmem:[#allocation5 + $0x220] sm:$0xff]
    %v252 = vld [vmem:[#allocation5 + $0x228] sm:$0xff]
    %v253 = vld [vmem:[#allocation5 + $0x230] sm:$0xff]
    %v254 = vld [vmem:[#allocation5 + $0x238] sm:$0xff]
    %v255 = vld [vmem:[#allocation5 + $0x240] sm:$0xff]
    %v256 = vld [vmem:[#allocation5 + $0x248] sm:$0xff]
    %v257 = vld [vmem:[#allocation5 + $0x250] sm:$0xff]
    %v258 = vld [vmem:[#allocation5 + $0x258] sm:$0xff]
    %v259 = vld [vmem:[#allocation5 + $0x260] sm:$0xff]
    %v260 = vld [vmem:[#allocation5 + $0x268] sm:$0xff]
    %v261 = vld [vmem:[#allocation5 + $0x270] sm:$0xff]
    %v262 = vld [vmem:[#allocation5 + $0x278] sm:$0xff]
    %v263 = vld [vmem:[#allocation5 + $0x280] sm:$0xff]
    %v264 = vld [vmem:[#allocation5 + $0x288] sm:$0xff]
    %v265 = vld [vmem:[#allocation5 + $0x290] sm:$0xff]
    %v266 = vld [vmem:[#allocation5 + $0x298] sm:$0xff]
    %v267 = vld [vmem:[#allocation5 + $0x2a0] sm:$0xff]
    %v268 = vld [vmem:[#allocation5 + $0x2a8] sm:$0xff]
    %v269 = vld [vmem:[#allocation5 + $0x2b0] sm:$0xff]
    %v270 = vld [vmem:[#allocation5 + $0x2b8] sm:$0xff]
    %v271 = vld [vmem:[#allocation5 + $0x2c0] sm:$0xff]
    %v272 = vld [vmem:[#allocation5 + $0x2c8] sm:$0xff]
    %v273 = vld [vmem:[#allocation5 + $0x2d0] sm:$0xff]
    %v274 = vld [vmem:[#allocation5 + $0x2d8] sm:$0xff]
    %v275 = vld [vmem:[#allocation5 + $0x2e0] sm:$0xff]
    %v276 = vld [vmem:[#allocation5 + $0x2e8] sm:$0xff]
    %v277 = vld [vmem:[#allocation5 + $0x2f0] sm:$0xff]
    %v278 = vld [vmem:[#allocation5 + $0x2f8] sm:$0xff]
    %v279 = vld [vmem:[#allocation5 + $0x300] sm:$0xff]
    %v280 = vld [vmem:[#allocation5 + $0x308] sm:$0xff]
    %v281 = vld [vmem:[#allocation5 + $0x310] sm:$0xff]
    %v282 = vld [vmem:[#allocation5 + $0x318] sm:$0xff]
    %v283 = vld [vmem:[#allocation5 + $0x320] sm:$0xff]
    %v284 = vld [vmem:[#allocation5 + $0x328] sm:$0xff]
    %v285 = vld [vmem:[#allocation5 + $0x330] sm:$0xff]
    %v286 = vld [vmem:[#allocation5 + $0x338] sm:$0xff]
    %v287 = vld [vmem:[#allocation5 + $0x340] sm:$0xff]
    %v288 = vld [vmem:[#allocation5 + $0x348] sm:$0xff]
    %v289 = vld [vmem:[#allocation5 + $0x350] sm:$0xff]
    %v290 = vld [vmem:[#allocation5 + $0x358] sm:$0xff]
    %v291 = vld [vmem:[#allocation5 + $0x360] sm:$0xff]
    %v292 = vld [vmem:[#allocation5 + $0x368] sm:$0xff]
    %v293 = vld [vmem:[#allocation5 + $0x370] sm:$0xff]
    %v294 = vld [vmem:[#allocation5 + $0x378] sm:$0xff]
    %v295 = vld [vmem:[#allocation5 + $0x380] sm:$0xff]
    %v296 = vld [vmem:[#allocation5 + $0x388] sm:$0xff]
    %v297 = vld [vmem:[#allocation5 + $0x390] sm:$0xff]
    %v298 = vld [vmem:[#allocation5 + $0x398] sm:$0xff]
    %v299 = vld [vmem:[#allocation5 + $0x3a0] sm:$0xff]
    %v300 = vld [vmem:[#allocation5 + $0x3a8] sm:$0xff]
    %v301 = vld [vmem:[#allocation5 + $0x3b0] sm:$0xff]
    %v302 = vld [vmem:[#allocation5 + $0x3b8] sm:$0xff]
    %v303 = vld [vmem:[#allocation5 + $0x3c0] sm:$0xff]
    %v304 = vld [vmem:[#allocation5 + $0x3c8] sm:$0xff]
    %v305 = vld [vmem:[#allocation5 + $0x3d0] sm:$0xff]
    %v306 = vld [vmem:[#allocation5 + $0x3d8] sm:$0xff]
    %v307 = vld [vmem:[#allocation5 + $0x3e0] sm:$0xff]
    %v308 = vld [vmem:[#allocation5 + $0x3e8] sm:$0xff]
    %v309 = vld [vmem:[#allocation5 + $0x3f0] sm:$0xff]
    %v310 = vld [vmem:[#allocation5 + $0x3f8] sm:$0xff]
    %v311 = vld [vmem:[#allocation5 + $0x400] sm:$0xff]
    %v312 = vld [vmem:[#allocation5 + $0x408] sm:$0xff]
    %v313 = vld [vmem:[#allocation5 + $0x410] sm:$0xff]
    %v314 = vld [vmem:[#allocation5 + $0x418] sm:$0xff]
    %v315 = vld [vmem:[#allocation5 + $0x420] sm:$0xff]
    %v316 = vld [vmem:[#allocation5 + $0x428] sm:$0xff]
    %v317 = vld [vmem:[#allocation5 + $0x430] sm:$0xff]
    %v318 = vld [vmem:[#allocation5 + $0x438] sm:$0xff]
    %v319 = vld [vmem:[#allocation5 + $0x440] sm:$0xff]
    %v320 = vld [vmem:[#allocation5 + $0x448] sm:$0xff]
    %v321 = vld [vmem:[#allocation5 + $0x450] sm:$0xff]
    %v322 = vld [vmem:[#allocation5 + $0x458] sm:$0xff]
    %v323 = vld [vmem:[#allocation5 + $0x460] sm:$0xff]
    %v324 = vld [vmem:[#allocation5 + $0x468] sm:$0xff]
    %v325 = vld [vmem:[#allocation5 + $0x470] sm:$0xff]
    %v326 = vld [vmem:[#allocation5 + $0x478] sm:$0xff]
    %v327 = vld [vmem:[#allocation5 + $0x480] sm:$0xff]
    %v328 = vld [vmem:[#allocation5 + $0x488] sm:$0xff]
    %v329 = vld [vmem:[#allocation5 + $0x490] sm:$0xff]
    %v330 = vld [vmem:[#allocation5 + $0x498] sm:$0xff]
    %v331 = vld [vmem:[#allocation5 + $0x4a0] sm:$0xff]
    %v332 = vld [vmem:[#allocation5 + $0x4a8] sm:$0xff]
    %v333 = vld [vmem:[#allocation5 + $0x4b0] sm:$0xff]
    %v334 = vld [vmem:[#allocation5 + $0x4b8] sm:$0xff]
    %v335 = vld [vmem:[#allocation5 + $0x4c0] sm:$0xff]
    %v336 = vld [vmem:[#allocation5 + $0x4c8] sm:$0xff]
    %v337 = vld [vmem:[#allocation5 + $0x4d0] sm:$0xff]
    %v338 = vld [vmem:[#allocation5 + $0x4d8] sm:$0xff]
    %v339 = vld [vmem:[#allocation5 + $0x4e0] sm:$0xff]
    %v340 = vld [vmem:[#allocation5 + $0x4e8] sm:$0xff]
    %v341 = vld [vmem:[#allocation5 + $0x4f0] sm:$0xff]
    %v342 = vld [vmem:[#allocation5 + $0x4f8] sm:$0xff]
    %v343 = vld [vmem:[#allocation5 + $0x500] sm:$0xff]
    %v344 = vld [vmem:[#allocation5 + $0x508] sm:$0xff]
    %v345 = vld [vmem:[#allocation5 + $0x510] sm:$0xff]
    %v346 = vld [vmem:[#allocation5 + $0x518] sm:$0xff]
    %v347 = vld [vmem:[#allocation5 + $0x520] sm:$0xff]
    %v348 = vld [vmem:[#allocation5 + $0x528] sm:$0xff]
    %v349 = vld [vmem:[#allocation5 + $0x530] sm:$0xff]
    %v350 = vld [vmem:[#allocation5 + $0x538] sm:$0xff]
    %v351 = vld [vmem:[#allocation5 + $0x540] sm:$0xff]
    %v352 = vld [vmem:[#allocation5 + $0x548] sm:$0xff]
    %v353 = vld [vmem:[#allocation5 + $0x550] sm:$0xff]
    %v354 = vld [vmem:[#allocation5 + $0x558] sm:$0xff]
    %v355 = vld [vmem:[#allocation5 + $0x560] sm:$0xff]
    %v356 = vld [vmem:[#allocation5 + $0x568] sm:$0xff]
    %v357 = vld [vmem:[#allocation5 + $0x570] sm:$0xff]
    %v358 = vld [vmem:[#allocation5 + $0x578] sm:$0xff]
    %v359 = vld [vmem:[#allocation5 + $0x580] sm:$0xff]
    %v360 = vld [vmem:[#allocation5 + $0x588] sm:$0xff]
    %v361 = vld [vmem:[#allocation5 + $0x590] sm:$0xff]
    %v362 = vld [vmem:[#allocation5 + $0x598] sm:$0xff]
    %v363 = vld [vmem:[#allocation5 + $0x5a0] sm:$0xff]
    %v364 = vld [vmem:[#allocation5 + $0x5a8] sm:$0xff]
    %v365 = vld [vmem:[#allocation5 + $0x5b0] sm:$0xff]
    %v366 = vld [vmem:[#allocation5 + $0x5b8] sm:$0xff]
    %v367 = vld [vmem:[#allocation5 + $0x5c0] sm:$0xff]
    %v368 = vld [vmem:[#allocation5 + $0x5c8] sm:$0xff]
    %v369 = vld [vmem:[#allocation5 + $0x5d0] sm:$0xff]
    %v370 = vld [vmem:[#allocation5 + $0x5d8] sm:$0xff]
    %v371 = vld [vmem:[#allocation5 + $0x5e0] sm:$0xff]
    %v372 = vld [vmem:[#allocation5 + $0x5e8] sm:$0xff]
    %v373 = vld [vmem:[#allocation5 + $0x5f0] sm:$0xff]
    %v374 = vld [vmem:[#allocation5 + $0x5f8] sm:$0xff]
    %v375 = vld [vmem:[#allocation5 + $0x600] sm:$0xff]
    %v376 = vld [vmem:[#allocation5 + $0x608] sm:$0xff]
    %v377 = vld [vmem:[#allocation5 + $0x610] sm:$0xff]
    %v378 = vld [vmem:[#allocation5 + $0x618] sm:$0xff]
    %v379 = vld [vmem:[#allocation5 + $0x620] sm:$0xff]
    %v380 = vld [vmem:[#allocation5 + $0x628] sm:$0xff]
    %v381 = vld [vmem:[#allocation5 + $0x630] sm:$0xff]
    %v382 = vld [vmem:[#allocation5 + $0x638] sm:$0xff]
    %v383 = vld [vmem:[#allocation5 + $0x640] sm:$0xff]
    %v384 = vld [vmem:[#allocation5 + $0x648] sm:$0xff]
    %v385 = vld [vmem:[#allocation5 + $0x650] sm:$0xff]
    %v386 = vld [vmem:[#allocation5 + $0x658] sm:$0xff]
    %v387 = vld [vmem:[#allocation5 + $0x660] sm:$0xff]
    %v388 = vld [vmem:[#allocation5 + $0x668] sm:$0xff]
    %v389 = vld [vmem:[#allocation5 + $0x670] sm:$0xff]
    %v390 = vld [vmem:[#allocation5 + $0x678] sm:$0xff]
    %v391 = vld [vmem:[#allocation5 + $0x680] sm:$0xff]
    %v392 = vld [vmem:[#allocation5 + $0x688] sm:$0xff]
    %v393 = vld [vmem:[#allocation5 + $0x690] sm:$0xff]
    %v394 = vld [vmem:[#allocation5 + $0x698] sm:$0xff]
    %v395 = vld [vmem:[#allocation5 + $0x6a0] sm:$0xff]
    %v396 = vld [vmem:[#allocation5 + $0x6a8] sm:$0xff]
    %v397 = vld [vmem:[#allocation5 + $0x6b0] sm:$0xff]
    %v398 = vld [vmem:[#allocation5 + $0x6b8] sm:$0xff]
    %v399 = vld [vmem:[#allocation5 + $0x6c0] sm:$0xff]
    %v400 = vld [vmem:[#allocation5 + $0x6c8] sm:$0xff]
    %v401 = vld [vmem:[#allocation5 + $0x6d0] sm:$0xff]
    %v402 = vld [vmem:[#allocation5 + $0x6d8] sm:$0xff]
    %v403 = vld [vmem:[#allocation5 + $0x6e0] sm:$0xff]
    %v404 = vld [vmem:[#allocation5 + $0x6e8] sm:$0xff]
    %v405 = vld [vmem:[#allocation5 + $0x6f0] sm:$0xff]
    %v406 = vld [vmem:[#allocation5 + $0x6f8] sm:$0xff]
    %v407 = vld [vmem:[#allocation5 + $0x700] sm:$0xff]
    %v408 = vld [vmem:[#allocation5 + $0x708] sm:$0xff]
    %v409 = vld [vmem:[#allocation5 + $0x710] sm:$0xff]
    %v410 = vld [vmem:[#allocation5 + $0x718] sm:$0xff]
    %v411 = vld [vmem:[#allocation5 + $0x720] sm:$0xff]
    %v412 = vld [vmem:[#allocation5 + $0x728] sm:$0xff]
    %v413 = vld [vmem:[#allocation5 + $0x730] sm:$0xff]
    %v414 = vld [vmem:[#allocation5 + $0x738] sm:$0xff]
    %v415 = vld [vmem:[#allocation5 + $0x740] sm:$0xff]
    %v416 = vld [vmem:[#allocation5 + $0x748] sm:$0xff]
    %v417 = vld [vmem:[#allocation5 + $0x750] sm:$0xff]
    %v418 = vld [vmem:[#allocation5 + $0x758] sm:$0xff]
    %v419 = vld [vmem:[#allocation5 + $0x760] sm:$0xff]
    %v420 = vld [vmem:[#allocation5 + $0x768] sm:$0xff]
    %v421 = vld [vmem:[#allocation5 + $0x770] sm:$0xff]
    %v422 = vld [vmem:[#allocation5 + $0x778] sm:$0xff]
    %v423 = vld [vmem:[#allocation5 + $0x780] sm:$0xff]
    %v424 = vld [vmem:[#allocation5 + $0x788] sm:$0xff]
    %v425 = vld [vmem:[#allocation5 + $0x790] sm:$0xff]
    %v426 = vld [vmem:[#allocation5 + $0x798] sm:$0xff]
    %v427 = vld [vmem:[#allocation5 + $0x7a0] sm:$0xff]
    %v428 = vld [vmem:[#allocation5 + $0x7a8] sm:$0xff]
    %v429 = vld [vmem:[#allocation5 + $0x7b0] sm:$0xff]
    %v430 = vld [vmem:[#allocation5 + $0x7b8] sm:$0xff]
    %v431 = vld [vmem:[#allocation5 + $0x7c0] sm:$0xff]
    %v432 = vld [vmem:[#allocation5 + $0x7c8] sm:$0xff]
    %v433 = vld [vmem:[#allocation5 + $0x7d0] sm:$0xff]
    %v434 = vld [vmem:[#allocation5 + $0x7d8] sm:$0xff]
    %v435 = vld [vmem:[#allocation5 + $0x7e0] sm:$0xff]
    %v436 = vld [vmem:[#allocation5 + $0x7e8] sm:$0xff]
    %v437 = vld [vmem:[#allocation5 + $0x7f0] sm:$0xff]
    %v438 = vld [vmem:[#allocation5 + $0x7f8] sm:$0xff]
    %v439 = vld [vmem:[#allocation5 + $0x800] sm:$0xff]
    %v440 = vld [vmem:[#allocation5 + $0x808] sm:$0xff]
    %v441 = vld [vmem:[#allocation5 + $0x810] sm:$0xff]
    %v442 = vld [vmem:[#allocation5 + $0x818] sm:$0xff]
    %v443 = vld [vmem:[#allocation5 + $0x820] sm:$0xff]
    %v444 = vld [vmem:[#allocation5 + $0x828] sm:$0xff]
    %v445 = vld [vmem:[#allocation5 + $0x830] sm:$0xff]
    %v446 = vld [vmem:[#allocation5 + $0x838] sm:$0xff]
    %v447 = vld [vmem:[#allocation5 + $0x840] sm:$0xff]
    %v448 = vld [vmem:[#allocation5 + $0x848] sm:$0xff]
    %v449 = vld [vmem:[#allocation5 + $0x850] sm:$0xff]
    %v450 = vld [vmem:[#allocation5 + $0x858] sm:$0xff]
    %v451 = vld [vmem:[#allocation5 + $0x860] sm:$0xff]
    %v452 = vld [vmem:[#allocation5 + $0x868] sm:$0xff]
    %v453 = vld [vmem:[#allocation5 + $0x870] sm:$0xff]
    %v454 = vld [vmem:[#allocation5 + $0x878] sm:$0xff]
    %v455 = vld [vmem:[#allocation5 + $0x880] sm:$0xff]
    %v456 = vld [vmem:[#allocation5 + $0x888] sm:$0xff]
    %v457 = vld [vmem:[#allocation5 + $0x890] sm:$0xff]
    %v458 = vld [vmem:[#allocation5 + $0x898] sm:$0xff]
    %v459 = vld [vmem:[#allocation5 + $0x8a0] sm:$0xff]
    %v460 = vld [vmem:[#allocation5 + $0x8a8] sm:$0xff]
    %v461 = vld [vmem:[#allocation5 + $0x8b0] sm:$0xff]
    %v462 = vld [vmem:[#allocation5 + $0x8b8] sm:$0xff]
    %v463 = vld [vmem:[#allocation5 + $0x8c0] sm:$0xff]
    %v464 = vld [vmem:[#allocation5 + $0x8c8] sm:$0xff]
    %v465 = vld [vmem:[#allocation5 + $0x8d0] sm:$0xff]
    %v466 = vld [vmem:[#allocation5 + $0x8d8] sm:$0xff]
    %v467 = vld [vmem:[#allocation5 + $0x8e0] sm:$0xff]
    %v468 = vld [vmem:[#allocation5 + $0x8e8] sm:$0xff]
    %v469 = vld [vmem:[#allocation5 + $0x8f0] sm:$0xff]
    %v470 = vld [vmem:[#allocation5 + $0x8f8] sm:$0xff]
    %v471 = vld [vmem:[#allocation5 + $0x900] sm:$0xff]
    %v472 = vld [vmem:[#allocation5 + $0x908] sm:$0xff]
    %v473 = vld [vmem:[#allocation5 + $0x910] sm:$0xff]
    %v474 = vld [vmem:[#allocation5 + $0x918] sm:$0xff]
    %v475 = vld [vmem:[#allocation5 + $0x920] sm:$0xff]
    %v476 = vld [vmem:[#allocation5 + $0x928] sm:$0xff]
    %v477 = vld [vmem:[#allocation5 + $0x930] sm:$0xff]
    %v478 = vld [vmem:[#allocation5 + $0x938] sm:$0xff]
    %v479 = vld [vmem:[#allocation5 + $0x940] sm:$0xff]
    %v480 = vld [vmem:[#allocation5 + $0x948] sm:$0xff]
    %v481 = vld [vmem:[#allocation5 + $0x950] sm:$0xff]
    %v482 = vld [vmem:[#allocation5 + $0x958] sm:$0xff]
    %v483 = vld [vmem:[#allocation5 + $0x960] sm:$0xff]
    %v484 = vld [vmem:[#allocation5 + $0x968] sm:$0xff]
    %v485 = vld [vmem:[#allocation5 + $0x970] sm:$0xff]
    %v486 = vld [vmem:[#allocation5 + $0x978] sm:$0xff]
    %v487 = vld [vmem:[#allocation5 + $0x980] sm:$0xff]
    %v488 = vld [vmem:[#allocation5 + $0x988] sm:$0xff]
    %v489 = vld [vmem:[#allocation5 + $0x990] sm:$0xff]
    %v490 = vld [vmem:[#allocation5 + $0x998] sm:$0xff]
    %v491 = vld [vmem:[#allocation5 + $0x9a0] sm:$0xff]
    %v492 = vld [vmem:[#allocation5 + $0x9a8] sm:$0xff]
    %v493 = vld [vmem:[#allocation5 + $0x9b0] sm:$0xff]
    %v494 = vld [vmem:[#allocation5 + $0x9b8] sm:$0xff]
    %v495 = vld [vmem:[#allocation5 + $0x9c0] sm:$0xff]
    %v496 = vld [vmem:[#allocation5 + $0x9c8] sm:$0xff]
    %v497 = vld [vmem:[#allocation5 + $0x9d0] sm:$0xff]
    %v498 = vld [vmem:[#allocation5 + $0x9d8] sm:$0xff]
    %v499 = vld [vmem:[#allocation5 + $0x9e0] sm:$0xff]
    %v500 = vld [vmem:[#allocation5 + $0x9e8] sm:$0xff]
    %v501 = vld [vmem:[#allocation5 + $0x9f0] sm:$0xff]
    %v502 = vld [vmem:[#allocation5 + $0x9f8] sm:$0xff]
    %v503 = vld [vmem:[#allocation5 + $0xa00] sm:$0xff]
    %v504 = vld [vmem:[#allocation5 + $0xa08] sm:$0xff]
    %v505 = vld [vmem:[#allocation5 + $0xa10] sm:$0xff]
    %v506 = vld [vmem:[#allocation5 + $0xa18] sm:$0xff]
    %v507 = vld [vmem:[#allocation5 + $0xa20] sm:$0xff]
    %v508 = vld [vmem:[#allocation5 + $0xa28] sm:$0xff]
    %v509 = vld [vmem:[#allocation5 + $0xa30] sm:$0xff]
    %v510 = vld [vmem:[#allocation5 + $0xa38] sm:$0xff]
    %v511 = vld [vmem:[#allocation5 + $0xa40] sm:$0xff]
    %v512 = vld [vmem:[#allocation5 + $0xa48] sm:$0xff]
    %v513 = vld [vmem:[#allocation5 + $0xa50] sm:$0xff]
    %v514 = vld [vmem:[#allocation5 + $0xa58] sm:$0xff]
    %v515 = vld [vmem:[#allocation5 + $0xa60] sm:$0xff]
    %v516 = vld [vmem:[#allocation5 + $0xa68] sm:$0xff]
    %v517 = vld [vmem:[#allocation5 + $0xa70] sm:$0xff]
    %v518 = vld [vmem:[#allocation5 + $0xa78] sm:$0xff]
    %v519 = vld [vmem:[#allocation5 + $0xa80] sm:$0xff]
    %v520 = vld [vmem:[#allocation5 + $0xa88] sm:$0xff]
    %v521 = vld [vmem:[#allocation5 + $0xa90] sm:$0xff]
    %v522 = vld [vmem:[#allocation5 + $0xa98] sm:$0xff]
    %v523 = vld [vmem:[#allocation5 + $0xaa0] sm:$0xff]
    %v524 = vld [vmem:[#allocation5 + $0xaa8] sm:$0xff]
    %v525 = vld [vmem:[#allocation5 + $0xab0] sm:$0xff]
    %v526 = vld [vmem:[#allocation5 + $0xab8] sm:$0xff]
    %v527 = vld [vmem:[#allocation5 + $0xac0] sm:$0xff]
    %v528 = vld [vmem:[#allocation5 + $0xac8] sm:$0xff]
    %v529 = vld [vmem:[#allocation5 + $0xad0] sm:$0xff]
    %v530 = vld [vmem:[#allocation5 + $0xad8] sm:$0xff]
    %v531 = vld [vmem:[#allocation5 + $0xae0] sm:$0xff]
    %v532 = vld [vmem:[#allocation5 + $0xae8] sm:$0xff]
    %v533 = vld [vmem:[#allocation5 + $0xaf0] sm:$0xff]
    %v534 = vld [vmem:[#allocation5 + $0xaf8] sm:$0xff]
    %v535 = vld [vmem:[#allocation5 + $0xb00] sm:$0xff]
    %v536 = vld [vmem:[#allocation5 + $0xb08] sm:$0xff]
    %v537 = vld [vmem:[#allocation5 + $0xb10] sm:$0xff]
    %v538 = vld [vmem:[#allocation5 + $0xb18] sm:$0xff]
    %v539 = vld [vmem:[#allocation5 + $0xb20] sm:$0xff]
    %v540 = vld [vmem:[#allocation5 + $0xb28] sm:$0xff]
    %v541 = vld [vmem:[#allocation5 + $0xb30] sm:$0xff]
    %v542 = vld [vmem:[#allocation5 + $0xb38] sm:$0xff]
    %v543 = vld [vmem:[#allocation5 + $0xb40] sm:$0xff]
    %v544 = vld [vmem:[#allocation5 + $0xb48] sm:$0xff]
    %v545 = vld [vmem:[#allocation5 + $0xb50] sm:$0xff]
    %v546 = vld [vmem:[#allocation5 + $0xb58] sm:$0xff]
    %v547 = vld [vmem:[#allocation5 + $0xb60] sm:$0xff]
    %v548 = vld [vmem:[#allocation5 + $0xb68] sm:$0xff]
    %v549 = vld [vmem:[#allocation5 + $0xb70] sm:$0xff]
    %v550 = vld [vmem:[#allocation5 + $0xb78] sm:$0xff]
    %v551 = vld [vmem:[#allocation5 + $0xb80] sm:$0xff]
    %v552 = vld [vmem:[#allocation5 + $0xb88] sm:$0xff]
    %v553 = vld [vmem:[#allocation5 + $0xb90] sm:$0xff]
    %v554 = vld [vmem:[#allocation5 + $0xb98] sm:$0xff]
    %v555 = vld [vmem:[#allocation5 + $0xba0] sm:$0xff]
    %v556 = vld [vmem:[#allocation5 + $0xba8] sm:$0xff]
    %v557 = vld [vmem:[#allocation5 + $0xbb0] sm:$0xff]
    %v558 = vld [vmem:[#allocation5 + $0xbb8] sm:$0xff]
    %v559 = vld [vmem:[#allocation5 + $0xbc0] sm:$0xff]
    %v560 = vld [vmem:[#allocation5 + $0xbc8] sm:$0xff]
    %v561 = vld [vmem:[#allocation5 + $0xbd0] sm:$0xff]
    %v562 = vld [vmem:[#allocation5 + $0xbd8] sm:$0xff]
    %v563 = vld [vmem:[#allocation5 + $0xbe0] sm:$0xff]
    %v564 = vld [vmem:[#allocation5 + $0xbe8] sm:$0xff]
    %v565 = vld [vmem:[#allocation5 + $0xbf0] sm:$0xff]
    %v566 = vld [vmem:[#allocation5 + $0xbf8] sm:$0xff]
    %v567 = vld [vmem:[#allocation5 + $0xc00] sm:$0xff]
    %v568 = vld [vmem:[#allocation5 + $0xc08] sm:$0xff]
    %v569 = vld [vmem:[#allocation5 + $0xc10] sm:$0xff]
    %v570 = vld [vmem:[#allocation5 + $0xc18] sm:$0xff]
    %v571 = vld [vmem:[#allocation5 + $0xc20] sm:$0xff]
    %v572 = vld [vmem:[#allocation5 + $0xc28] sm:$0xff]
    %v573 = vld [vmem:[#allocation5 + $0xc30] sm:$0xff]
    %v574 = vld [vmem:[#allocation5 + $0xc38] sm:$0xff]
    %v575 = vld [vmem:[#allocation7] sm:$0xf]
    %v577 = vlaneseq
    %v578 = vshrl.u32 %v577, 7
    %v579 = vsub.s32 0, %v578
    %v580 = vrot.slane %v575, %v579
    %v581 = vlaneseq
    %v582 = vshrl.u32 %v581, 7
    %v583 = vsub.s32 1, %v582
    %v584 = vrot.slane %v575, %v583
    %v585 = vlaneseq
    %v586 = vshrl.u32 %v585, 7
    %v587 = vsub.s32 2, %v586
    %v588 = vrot.slane %v575, %v587
    %v589 = vlaneseq
    %v590 = vshrl.u32 %v589, 7
    %v591 = vsub.s32 3, %v590
    %v592 = vrot.slane %v575, %v591
    %vm597 = vcmask 130048
    %v599 = vsel %vm597, %v182, 0
    %601 = vmatprep.subr.mxu0 %v244
    %602 = vmatpush1.msra.mxu0 %v243
    %603 = vmatprep.subr.mxu0 %v240
    %604 = vmatpush1.msra.mxu0 %v239
    %605 = vmatprep.subr.mxu0 %v236
    %606 = vmatpush1.msra.mxu0 %v235
    %607 = vmatprep.subr.mxu0 %v232
    %608 = vmatpush1.msra.mxu0 %v231
    %609 = vmatprep.subr.mxu0 %v228
    %610 = vmatpush1.msra.mxu0 %v227
    %611 = vmatprep.subr.mxu0 %v224
    %612 = vmatpush1.msra.mxu0 %v223
    %613 = vmatprep.subr.mxu0 %v220
    %614 = vmatpush1.msra.mxu0 %v219
    %615 = vmatprep.subr.mxu0 %v216
    %616 = vmatpush1.msra.mxu0 %v215
    %617 = vmatprep.subr.mxu0 %v212
    %618 = vmatpush1.msra.mxu0 %v211
    %619 = vmatprep.subr.mxu0 %v208
    %620 = vmatpush1.msra.mxu0 %v207
    %621 = vmatprep.subr.mxu0 %v204
    %622 = vmatpush1.msra.mxu0 %v203
    %623 = vmatprep.subr.mxu0 %v200
    %624 = vmatpush1.msra.mxu0 %v199
    %625 = vmatprep.subr.mxu0 %v196
    %626 = vmatpush1.msra.mxu0 %v195
    %627 = vmatprep.subr.mxu0 %v192
    %628 = vmatpush1.msra.mxu0 %v191
    %629 = vmatprep.subr.mxu0 %v188
    %630 = vmatpush1.msra.mxu0 %v187
    %631 = vmatprep.subr.mxu0 %v184
    %632 = vmatpush1.msra.mxu0 %v183
    %633 = vmatprep.subr.mxu0 %v308
    %634 = vmatpush2.msra.mxu0 %v307
    %635 = vmatprep.subr.mxu0 %v304
    %636 = vmatpush2.msra.mxu0 %v303
    %637 = vmatprep.subr.mxu0 %v300
    %638 = vmatpush2.msra.mxu0 %v299
    %639 = vmatprep.subr.mxu0 %v296
    %640 = vmatpush2.msra.mxu0 %v295
    %641 = vmatprep.subr.mxu0 %v292
    %642 = vmatpush2.msra.mxu0 %v291
    %643 = vmatprep.subr.mxu0 %v288
    %644 = vmatpush2.msra.mxu0 %v287
    %645 = vmatprep.subr.mxu0 %v284
    %646 = vmatpush2.msra.mxu0 %v283
    %647 = vmatprep.subr.mxu0 %v280
    %648 = vmatpush2.msra.mxu0 %v279
    %649 = vmatprep.subr.mxu0 %v276
    %650 = vmatpush2.msra.mxu0 %v275
    %651 = vmatprep.subr.mxu0 %v272
    %652 = vmatpush2.msra.mxu0 %v271
    %653 = vmatprep.subr.mxu0 %v268
    %654 = vmatpush2.msra.mxu0 %v267
    %655 = vmatprep.subr.mxu0 %v264
    %656 = vmatpush2.msra.mxu0 %v263
    %657 = vmatprep.subr.mxu0 %v260
    %658 = vmatpush2.msra.mxu0 %v259
    %659 = vmatprep.subr.mxu0 %v256
    %660 = vmatpush2.msra.mxu0 %v255
    %661 = vmatprep.subr.mxu0 %v252
    %662 = vmatpush2.msra.mxu0 %v251
    %663 = vmatprep.subr.mxu0 %v248
    %664 = vmatpush2.msra.mxu0 %v247
    %665 = vmatprep.mubr.f32.mxu0 %v177
    %666 = vmatmul.mubr.f32.gmra.mxu0 %v176
    %v667 = vpop.f32.mrf.mxu0
    %v668 = vadd.f32 %v580, %v667
    %v669 = vpop.f32.mrf.mxu0
    %v670 = vadd.f32 %v584, %v669
    %671 = vdwg.mxu0
    %672 = vmatprep.subr.mxu0 %v372
    %673 = vmatpush1.msra.mxu0 %v371
    %674 = vmatprep.subr.mxu0 %v368
    %675 = vmatpush1.msra.mxu0 %v367
    %676 = vmatprep.subr.mxu0 %v364
    %677 = vmatpush1.msra.mxu0 %v363
    %678 = vmatprep.subr.mxu0 %v360
    %679 = vmatpush1.msra.mxu0 %v359
    %680 = vmatprep.subr.mxu0 %v356
    %681 = vmatpush1.msra.mxu0 %v355
    %682 = vmatprep.subr.mxu0 %v352
    %683 = vmatpush1.msra.mxu0 %v351
    %684 = vmatprep.subr.mxu0 %v348
    %685 = vmatpush1.msra.mxu0 %v347
    %686 = vmatprep.subr.mxu0 %v344
    %687 = vmatpush1.msra.mxu0 %v343
    %688 = vmatprep.subr.mxu0 %v340
    %689 = vmatpush1.msra.mxu0 %v339
    %690 = vmatprep.subr.mxu0 %v336
    %691 = vmatpush1.msra.mxu0 %v335
    %692 = vmatprep.subr.mxu0 %v332
    %693 = vmatpush1.msra.mxu0 %v331
    %694 = vmatprep.subr.mxu0 %v328
    %695 = vmatpush1.msra.mxu0 %v327
    %696 = vmatprep.subr.mxu0 %v324
    %697 = vmatpush1.msra.mxu0 %v323
    %698 = vmatprep.subr.mxu0 %v320
    %699 = vmatpush1.msra.mxu0 %v319
    %700 = vmatprep.subr.mxu0 %v316
    %701 = vmatpush1.msra.mxu0 %v315
    %702 = vmatprep.subr.mxu0 %v312
    %703 = vmatpush1.msra.mxu0 %v311
    %704 = vmatprep.subr.mxu0 %v436
    %705 = vmatpush2.msra.mxu0 %v435
    %706 = vmatprep.subr.mxu0 %v432
    %707 = vmatpush2.msra.mxu0 %v431
    %708 = vmatprep.subr.mxu0 %v428
    %709 = vmatpush2.msra.mxu0 %v427
    %710 = vmatprep.subr.mxu0 %v424
    %711 = vmatpush2.msra.mxu0 %v423
    %712 = vmatprep.subr.mxu0 %v420
    %713 = vmatpush2.msra.mxu0 %v419
    %714 = vmatprep.subr.mxu0 %v416
    %715 = vmatpush2.msra.mxu0 %v415
    %716 = vmatprep.subr.mxu0 %v412
    %717 = vmatpush2.msra.mxu0 %v411
    %718 = vmatprep.subr.mxu0 %v408
    %719 = vmatpush2.msra.mxu0 %v407
    %720 = vmatprep.subr.mxu0 %v404
    %721 = vmatpush2.msra.mxu0 %v403
    %722 = vmatprep.subr.mxu0 %v400
    %723 = vmatpush2.msra.mxu0 %v399
    %724 = vmatprep.subr.mxu0 %v396
    %725 = vmatpush2.msra.mxu0 %v395
    %726 = vmatprep.subr.mxu0 %v392
    %727 = vmatpush2.msra.mxu0 %v391
    %728 = vmatprep.subr.mxu0 %v388
    %729 = vmatpush2.msra.mxu0 %v387
    %730 = vmatprep.subr.mxu0 %v384
    %731 = vmatpush2.msra.mxu0 %v383
    %732 = vmatprep.subr.mxu0 %v380
    %733 = vmatpush2.msra.mxu0 %v379
    %734 = vmatprep.subr.mxu0 %v376
    %735 = vmatpush2.msra.mxu0 %v375
    %736 = vmatprep.mubr.f32.mxu0 %v179
    %737 = vmatmul.mubr.f32.gmra.mxu0 %v178
    %v738 = vpop.f32.mrf.mxu0
    %v739 = vadd.f32 %v668, %v738
    %v740 = vpop.f32.mrf.mxu0
    %v741 = vadd.f32 %v670, %v740
    %742 = vdwg.mxu0
    %743 = vmatprep.subr.mxu0 %v500
    %744 = vmatpush1.msra.mxu0 %v499
    %745 = vmatprep.subr.mxu0 %v496
    %746 = vmatpush1.msra.mxu0 %v495
    %747 = vmatprep.subr.mxu0 %v492
    %748 = vmatpush1.msra.mxu0 %v491
    %749 = vmatprep.subr.mxu0 %v488
    %750 = vmatpush1.msra.mxu0 %v487
    %751 = vmatprep.subr.mxu0 %v484
    %752 = vmatpush1.msra.mxu0 %v483
    %753 = vmatprep.subr.mxu0 %v480
    %754 = vmatpush1.msra.mxu0 %v479
    %755 = vmatprep.subr.mxu0 %v476
    %756 = vmatpush1.msra.mxu0 %v475
    %757 = vmatprep.subr.mxu0 %v472
    %758 = vmatpush1.msra.mxu0 %v471
    %759 = vmatprep.subr.mxu0 %v468
    %760 = vmatpush1.msra.mxu0 %v467
    %761 = vmatprep.subr.mxu0 %v464
    %762 = vmatpush1.msra.mxu0 %v463
    %763 = vmatprep.subr.mxu0 %v460
    %764 = vmatpush1.msra.mxu0 %v459
    %765 = vmatprep.subr.mxu0 %v456
    %766 = vmatpush1.msra.mxu0 %v455
    %767 = vmatprep.subr.mxu0 %v452
    %768 = vmatpush1.msra.mxu0 %v451
    %769 = vmatprep.subr.mxu0 %v448
    %770 = vmatpush1.msra.mxu0 %v447
    %771 = vmatprep.subr.mxu0 %v444
    %772 = vmatpush1.msra.mxu0 %v443
    %773 = vmatprep.subr.mxu0 %v440
    %774 = vmatpush1.msra.mxu0 %v439
    %775 = vmatprep.subr.mxu0 %v564
    %776 = vmatpush2.msra.mxu0 %v563
    %777 = vmatprep.subr.mxu0 %v560
    %778 = vmatpush2.msra.mxu0 %v559
    %779 = vmatprep.subr.mxu0 %v556
    %780 = vmatpush2.msra.mxu0 %v555
    %781 = vmatprep.subr.mxu0 %v552
    %782 = vmatpush2.msra.mxu0 %v551
    %783 = vmatprep.subr.mxu0 %v548
    %784 = vmatpush2.msra.mxu0 %v547
    %785 = vmatprep.subr.mxu0 %v544
    %786 = vmatpush2.msra.mxu0 %v543
    %787 = vmatprep.subr.mxu0 %v540
    %788 = vmatpush2.msra.mxu0 %v539
    %789 = vmatprep.subr.mxu0 %v536
    %790 = vmatpush2.msra.mxu0 %v535
    %791 = vmatprep.subr.mxu0 %v532
    %792 = vmatpush2.msra.mxu0 %v531
    %793 = vmatprep.subr.mxu0 %v528
    %794 = vmatpush2.msra.mxu0 %v527
    %795 = vmatprep.subr.mxu0 %v524
    %796 = vmatpush2.msra.mxu0 %v523
    %797 = vmatprep.subr.mxu0 %v520
    %798 = vmatpush2.msra.mxu0 %v519
    %799 = vmatprep.subr.mxu0 %v516
    %800 = vmatpush2.msra.mxu0 %v515
    %801 = vmatprep.subr.mxu0 %v512
    %802 = vmatpush2.msra.mxu0 %v511
    %803 = vmatprep.subr.mxu0 %v508
    %804 = vmatpush2.msra.mxu0 %v507
    %805 = vmatprep.subr.mxu0 %v504
    %806 = vmatpush2.msra.mxu0 %v503
    %807 = vmatprep.mubr.f32.mxu0 %v181
    %808 = vmatmul.mubr.f32.gmra.mxu0 %v180
    %v809 = vpop.f32.mrf.mxu0
    %v810 = vadd.f32 %v739, %v809
    %v811 = vpop.f32.mrf.mxu0
    %v812 = vadd.f32 %v741, %v811
    %813 = vdwg.mxu0
    %814 = vmatprep.subr.mxu0 0.0
    %815 = vmatpush1.msra.mxu0 0.0
    %816 = vmatprep.subr.mxu0 0.0
    %817 = vmatpush1.msra.mxu0 0.0
    %818 = vmatprep.subr.mxu0 0.0
    %819 = vmatpush1.msra.mxu0 0.0
    %820 = vmatprep.subr.mxu0 0.0
    %821 = vmatpush1.msra.mxu0 0.0
    %822 = vmatprep.subr.mxu0 0.0
    %823 = vmatpush1.msra.mxu0 0.0
    %824 = vmatprep.subr.mxu0 0.0
    %825 = vmatpush1.msra.mxu0 0.0
    %826 = vmatprep.subr.mxu0 0.0
    %827 = vmatpush1.msra.mxu0 0.0
    %828 = vmatprep.subr.mxu0 0.0
    %829 = vmatpush1.msra.mxu0 0.0
    %830 = vmatprep.subr.mxu0 0.0
    %831 = vmatpush1.msra.mxu0 0.0
    %832 = vmatprep.subr.mxu0 0.0
    %833 = vmatpush1.msra.mxu0 0.0
    %834 = vmatprep.subr.mxu0 0.0
    %835 = vmatpush1.msra.mxu0 0.0
    %836 = vmatprep.subr.mxu0 0.0
    %837 = vmatpush1.msra.mxu0 0.0
    %838 = vmatprep.subr.mxu0 0.0
    %839 = vmatpush1.msra.mxu0 0.0
    %840 = vmatprep.subr.mxu0 0.0
    %841 = vmatpush1.msra.mxu0 0.0
    %842 = vmatprep.subr.mxu0 %v572
    %843 = vmatpush1.msra.mxu0 %v571
    %844 = vmatprep.subr.mxu0 %v568
    %845 = vmatpush1.msra.mxu0 %v567
    %846 = vmatprep.subr.mxu0 0.0
    %847 = vmatpush2.msra.mxu0 0.0
    %848 = vmatprep.subr.mxu0 0.0
    %849 = vmatpush2.msra.mxu0 0.0
    %850 = vmatprep.subr.mxu0 0.0
    %851 = vmatpush2.msra.mxu0 0.0
    %852 = vmatprep.subr.mxu0 0.0
    %853 = vmatpush2.msra.mxu0 0.0
    %854 = vmatprep.subr.mxu0 0.0
    %855 = vmatpush2.msra.mxu0 0.0
    %856 = vmatprep.subr.mxu0 0.0
    %857 = vmatpush2.msra.mxu0 0.0
    %858 = vmatprep.subr.mxu0 0.0
    %859 = vmatpush2.msra.mxu0 0.0
    %860 = vmatprep.subr.mxu0 0.0
    %861 = vmatpush2.msra.mxu0 0.0
    %862 = vmatprep.subr.mxu0 0.0
    %863 = vmatpush2.msra.mxu0 0.0
    %864 = vmatprep.subr.mxu0 0.0
    %865 = vmatpush2.msra.mxu0 0.0
    %866 = vmatprep.subr.mxu0 0.0
    %867 = vmatpush2.msra.mxu0 0.0
    %868 = vmatprep.subr.mxu0 0.0
    %869 = vmatpush2.msra.mxu0 0.0
    %870 = vmatprep.subr.mxu0 0.0
    %871 = vmatpush2.msra.mxu0 0.0
    %872 = vmatprep.subr.mxu0 0.0
    %873 = vmatpush2.msra.mxu0 0.0
    %874 = vmatprep.subr.mxu0 0.0
    %875 = vmatpush2.msra.mxu0 0.0
    %876 = vmatprep.subr.mxu0 0.0
    %877 = vmatpush2.msra.mxu0 0.0
    %878 = vmatprep.mubr.f32.mxu0 0.0
    %879 = vmatmul.mubr.f32.gmra.mxu0 %v599
    %v880 = vpop.f32.mrf.mxu0
    %v881 = vadd.f32 %v810, %v880
    %v882 = vpop.f32.mrf.mxu0
    %v883 = vadd.f32 %v812, %v882
    %884 = vdwg.mxu0
    %885 = vmatprep.subr.mxu0 %v246
    %886 = vmatpush1.msra.mxu0 %v245
    %887 = vmatprep.subr.mxu0 %v242
    %888 = vmatpush1.msra.mxu0 %v241
    %889 = vmatprep.subr.mxu0 %v238
    %890 = vmatpush1.msra.mxu0 %v237
    %891 = vmatprep.subr.mxu0 %v234
    %892 = vmatpush1.msra.mxu0 %v233
    %893 = vmatprep.subr.mxu0 %v230
    %894 = vmatpush1.msra.mxu0 %v229
    %895 = vmatprep.subr.mxu0 %v226
    %896 = vmatpush1.msra.mxu0 %v225
    %897 = vmatprep.subr.mxu0 %v222
    %898 = vmatpush1.msra.mxu0 %v221
    %899 = vmatprep.subr.mxu0 %v218
    %900 = vmatpush1.msra.mxu0 %v217
    %901 = vmatprep.subr.mxu0 %v214
    %902 = vmatpush1.msra.mxu0 %v213
    %903 = vmatprep.subr.mxu0 %v210
    %904 = vmatpush1.msra.mxu0 %v209
    %905 = vmatprep.subr.mxu0 %v206
    %906 = vmatpush1.msra.mxu0 %v205
    %907 = vmatprep.subr.mxu0 %v202
    %908 = vmatpush1.msra.mxu0 %v201
    %909 = vmatprep.subr.mxu0 %v198
    %910 = vmatpush1.msra.mxu0 %v197
    %911 = vmatprep.subr.mxu0 %v194
    %912 = vmatpush1.msra.mxu0 %v193
    %913 = vmatprep.subr.mxu0 %v190
    %914 = vmatpush1.msra.mxu0 %v189
    %915 = vmatprep.subr.mxu0 %v186
    %916 = vmatpush1.msra.mxu0 %v185
    %917 = vmatprep.subr.mxu0 %v310
    %918 = vmatpush2.msra.mxu0 %v309
    %919 = vmatprep.subr.mxu0 %v306
    %920 = vmatpush2.msra.mxu0 %v305
    %921 = vmatprep.subr.mxu0 %v302
    %922 = vmatpush2.msra.mxu0 %v301
    %923 = vmatprep.subr.mxu0 %v298
    %924 = vmatpush2.msra.mxu0 %v297
    %925 = vmatprep.subr.mxu0 %v294
    %926 = vmatpush2.msra.mxu0 %v293
    %927 = vmatprep.subr.mxu0 %v290
    %928 = vmatpush2.msra.mxu0 %v289
    %929 = vmatprep.subr.mxu0 %v286
    %930 = vmatpush2.msra.mxu0 %v285
    %931 = vmatprep.subr.mxu0 %v282
    %932 = vmatpush2.msra.mxu0 %v281
    %933 = vmatprep.subr.mxu0 %v278
    %934 = vmatpush2.msra.mxu0 %v277
    %935 = vmatprep.subr.mxu0 %v274
    %936 = vmatpush2.msra.mxu0 %v273
    %937 = vmatprep.subr.mxu0 %v270
    %938 = vmatpush2.msra.mxu0 %v269
    %939 = vmatprep.subr.mxu0 %v266
    %940 = vmatpush2.msra.mxu0 %v265
    %941 = vmatprep.subr.mxu0 %v262
    %942 = vmatpush2.msra.mxu0 %v261
    %943 = vmatprep.subr.mxu0 %v258
    %944 = vmatpush2.msra.mxu0 %v257
    %945 = vmatprep.subr.mxu0 %v254
    %946 = vmatpush2.msra.mxu0 %v253
    %947 = vmatprep.subr.mxu0 %v250
    %948 = vmatpush2.msra.mxu0 %v249
    %949 = vmatprep.mubr.f32.mxu0 %v177
    %950 = vmatmul.mubr.f32.gmra.mxu0 %v176
    %v951 = vpop.f32.mrf.mxu0
    %v952 = vadd.f32 %v588, %v951
    %v953 = vpop.f32.mrf.mxu0
    %v954 = vadd.f32 %v592, %v953
    %955 = vdwg.mxu0
    %956 = vmatprep.subr.mxu0 %v374
    %957 = vmatpush1.msra.mxu0 %v373
    %958 = vmatprep.subr.mxu0 %v370
    %959 = vmatpush1.msra.mxu0 %v369
    %960 = vmatprep.subr.mxu0 %v366
    %961 = vmatpush1.msra.mxu0 %v365
    %962 = vmatprep.subr.mxu0 %v362
    %963 = vmatpush1.msra.mxu0 %v361
    %964 = vmatprep.subr.mxu0 %v358
    %965 = vmatpush1.msra.mxu0 %v357
    %966 = vmatprep.subr.mxu0 %v354
    %967 = vmatpush1.msra.mxu0 %v353
    %968 = vmatprep.subr.mxu0 %v350
    %969 = vmatpush1.msra.mxu0 %v349
    %970 = vmatprep.subr.mxu0 %v346
    %971 = vmatpush1.msra.mxu0 %v345
    %972 = vmatprep.subr.mxu0 %v342
    %973 = vmatpush1.msra.mxu0 %v341
    %974 = vmatprep.subr.mxu0 %v338
    %975 = vmatpush1.msra.mxu0 %v337
    %976 = vmatprep.subr.mxu0 %v334
    %977 = vmatpush1.msra.mxu0 %v333
    %978 = vmatprep.subr.mxu0 %v330
    %979 = vmatpush1.msra.mxu0 %v329
    %980 = vmatprep.subr.mxu0 %v326
    %981 = vmatpush1.msra.mxu0 %v325
    %982 = vmatprep.subr.mxu0 %v322
    %983 = vmatpush1.msra.mxu0 %v321
    %984 = vmatprep.subr.mxu0 %v318
    %985 = vmatpush1.msra.mxu0 %v317
    %986 = vmatprep.subr.mxu0 %v314
    %987 = vmatpush1.msra.mxu0 %v313
    %988 = vmatprep.subr.mxu0 %v438
    %989 = vmatpush2.msra.mxu0 %v437
    %990 = vmatprep.subr.mxu0 %v434
    %991 = vmatpush2.msra.mxu0 %v433
    %992 = vmatprep.subr.mxu0 %v430
    %993 = vmatpush2.msra.mxu0 %v429
    %994 = vmatprep.subr.mxu0 %v426
    %995 = vmatpush2.msra.mxu0 %v425
    %996 = vmatprep.subr.mxu0 %v422
    %997 = vmatpush2.msra.mxu0 %v421
    %998 = vmatprep.subr.mxu0 %v418
    %999 = vmatpush2.msra.mxu0 %v417
    %1000 = vmatprep.subr.mxu0 %v414
    %1001 = vmatpush2.msra.mxu0 %v413
    %1002 = vmatprep.subr.mxu0 %v410
    %1003 = vmatpush2.msra.mxu0 %v409
    %1004 = vmatprep.subr.mxu0 %v406
    %1005 = vmatpush2.msra.mxu0 %v405
    %1006 = vmatprep.subr.mxu0 %v402
    %1007 = vmatpush2.msra.mxu0 %v401
    %1008 = vmatprep.subr.mxu0 %v398
    %1009 = vmatpush2.msra.mxu0 %v397
    %1010 = vmatprep.subr.mxu0 %v394
    %1011 = vmatpush2.msra.mxu0 %v393
    %1012 = vmatprep.subr.mxu0 %v390
    %1013 = vmatpush2.msra.mxu0 %v389
    %1014 = vmatprep.subr.mxu0 %v386
    %1015 = vmatpush2.msra.mxu0 %v385
    %1016 = vmatprep.subr.mxu0 %v382
    %1017 = vmatpush2.msra.mxu0 %v381
    %1018 = vmatprep.subr.mxu0 %v378
    %1019 = vmatpush2.msra.mxu0 %v377
    %1020 = vmatprep.mubr.f32.mxu0 %v179
    %1021 = vmatmul.mubr.f32.gmra.mxu0 %v178
    %v1022 = vpop.f32.mrf.mxu0
    %v1023 = vadd.f32 %v952, %v1022
    %v1024 = vpop.f32.mrf.mxu0
    %v1025 = vadd.f32 %v954, %v1024
    %1026 = vdwg.mxu0
    %1027 = vmatprep.subr.mxu0 %v502
    %1028 = vmatpush1.msra.mxu0 %v501
    %1029 = vmatprep.subr.mxu0 %v498
    %1030 = vmatpush1.msra.mxu0 %v497
    %1031 = vmatprep.subr.mxu0 %v494
    %1032 = vmatpush1.msra.mxu0 %v493
    %1033 = vmatprep.subr.mxu0 %v490
    %1034 = vmatpush1.msra.mxu0 %v489
    %1035 = vmatprep.subr.mxu0 %v486
    %1036 = vmatpush1.msra.mxu0 %v485
    %1037 = vmatprep.subr.mxu0 %v482
    %1038 = vmatpush1.msra.mxu0 %v481
    %1039 = vmatprep.subr.mxu0 %v478
    %1040 = vmatpush1.msra.mxu0 %v477
    %1041 = vmatprep.subr.mxu0 %v474
    %1042 = vmatpush1.msra.mxu0 %v473
    %1043 = vmatprep.subr.mxu0 %v470
    %1044 = vmatpush1.msra.mxu0 %v469
    %1045 = vmatprep.subr.mxu0 %v466
    %1046 = vmatpush1.msra.mxu0 %v465
    %1047 = vmatprep.subr.mxu0 %v462
    %1048 = vmatpush1.msra.mxu0 %v461
    %1049 = vmatprep.subr.mxu0 %v458
    %1050 = vmatpush1.msra.mxu0 %v457
    %1051 = vmatprep.subr.mxu0 %v454
    %1052 = vmatpush1.msra.mxu0 %v453
    %1053 = vmatprep.subr.mxu0 %v450
    %1054 = vmatpush1.msra.mxu0 %v449
    %1055 = vmatprep.subr.mxu0 %v446
    %1056 = vmatpush1.msra.mxu0 %v445
    %1057 = vmatprep.subr.mxu0 %v442
    %1058 = vmatpush1.msra.mxu0 %v441
    %1059 = vmatprep.subr.mxu0 %v566
    %1060 = vmatpush2.msra.mxu0 %v565
    %1061 = vmatprep.subr.mxu0 %v562
    %1062 = vmatpush2.msra.mxu0 %v561
    %1063 = vmatprep.subr.mxu0 %v558
    %1064 = vmatpush2.msra.mxu0 %v557
    %1065 = vmatprep.subr.mxu0 %v554
    %1066 = vmatpush2.msra.mxu0 %v553
    %1067 = vmatprep.subr.mxu0 %v550
    %1068 = vmatpush2.msra.mxu0 %v549
    %1069 = vmatprep.subr.mxu0 %v546
    %1070 = vmatpush2.msra.mxu0 %v545
    %1071 = vmatprep.subr.mxu0 %v542
    %1072 = vmatpush2.msra.mxu0 %v541
    %1073 = vmatprep.subr.mxu0 %v538
    %1074 = vmatpush2.msra.mxu0 %v537
    %1075 = vmatprep.subr.mxu0 %v534
    %1076 = vmatpush2.msra.mxu0 %v533
    %1077 = vmatprep.subr.mxu0 %v530
    %1078 = vmatpush2.msra.mxu0 %v529
    %1079 = vmatprep.subr.mxu0 %v526
    %1080 = vmatpush2.msra.mxu0 %v525
    %1081 = vmatprep.subr.mxu0 %v522
    %1082 = vmatpush2.msra.mxu0 %v521
    %1083 = vmatprep.subr.mxu0 %v518
    %1084 = vmatpush2.msra.mxu0 %v517
    %1085 = vmatprep.subr.mxu0 %v514
    %1086 = vmatpush2.msra.mxu0 %v513
    %1087 = vmatprep.subr.mxu0 %v510
    %1088 = vmatpush2.msra.mxu0 %v509
    %1089 = vmatprep.subr.mxu0 %v506
    %1090 = vmatpush2.msra.mxu0 %v505
    %1091 = vmatprep.mubr.f32.mxu0 %v181
    %1092 = vmatmul.mubr.f32.gmra.mxu0 %v180
    %v1093 = vpop.f32.mrf.mxu0
    %v1094 = vadd.f32 %v1023, %v1093
    %v1095 = vpop.f32.mrf.mxu0
    %v1096 = vadd.f32 %v1025, %v1095
    %1097 = vdwg.mxu0
    %1098 = vmatprep.subr.mxu0 0.0
    %1099 = vmatpush1.msra.mxu0 0.0
    %1100 = vmatprep.subr.mxu0 0.0
    %1101 = vmatpush1.msra.mxu0 0.0
    %1102 = vmatprep.subr.mxu0 0.0
    %1103 = vmatpush1.msra.mxu0 0.0
    %1104 = vmatprep.subr.mxu0 0.0
    %1105 = vmatpush1.msra.mxu0 0.0
    %1106 = vmatprep.subr.mxu0 0.0
    %1107 = vmatpush1.msra.mxu0 0.0
    %1108 = vmatprep.subr.mxu0 0.0
    %1109 = vmatpush1.msra.mxu0 0.0
    %1110 = vmatprep.subr.mxu0 0.0
    %1111 = vmatpush1.msra.mxu0 0.0
    %1112 = vmatprep.subr.mxu0 0.0
    %1113 = vmatpush1.msra.mxu0 0.0
    %1114 = vmatprep.subr.mxu0 0.0
    %1115 = vmatpush1.msra.mxu0 0.0
    %1116 = vmatprep.subr.mxu0 0.0
    %1117 = vmatpush1.msra.mxu0 0.0
    %1118 = vmatprep.subr.mxu0 0.0
    %1119 = vmatpush1.msra.mxu0 0.0
    %1120 = vmatprep.subr.mxu0 0.0
    %1121 = vmatpush1.msra.mxu0 0.0
    %1122 = vmatprep.subr.mxu0 0.0
    %1123 = vmatpush1.msra.mxu0 0.0
    %1124 = vmatprep.subr.mxu0 0.0
    %1125 = vmatpush1.msra.mxu0 0.0
    %1126 = vmatprep.subr.mxu0 %v574
    %1127 = vmatpush1.msra.mxu0 %v573
    %1128 = vmatprep.subr.mxu0 %v570
    %1129 = vmatpush1.msra.mxu0 %v569
    %1130 = vmatprep.subr.mxu0 0.0
    %1131 = vmatpush2.msra.mxu0 0.0
    %1132 = vmatprep.subr.mxu0 0.0
    %1133 = vmatpush2.msra.mxu0 0.0
    %1134 = vmatprep.subr.mxu0 0.0
    %1135 = vmatpush2.msra.mxu0 0.0
    %1136 = vmatprep.subr.mxu0 0.0
    %1137 = vmatpush2.msra.mxu0 0.0
    %1138 = vmatprep.subr.mxu0 0.0
    %1139 = vmatpush2.msra.mxu0 0.0
    %1140 = vmatprep.subr.mxu0 0.0
    %1141 = vmatpush2.msra.mxu0 0.0
    %1142 = vmatprep.subr.mxu0 0.0
    %1143 = vmatpush2.msra.mxu0 0.0
    %1144 = vmatprep.subr.mxu0 0.0
    %1145 = vmatpush2.msra.mxu0 0.0
    %1146 = vmatprep.subr.mxu0 0.0
    %1147 = vmatpush2.msra.mxu0 0.0
    %1148 = vmatprep.subr.mxu0 0.0
    %1149 = vmatpush2.msra.mxu0 0.0
    %1150 = vmatprep.subr.mxu0 0.0
    %1151 = vmatpush2.msra.mxu0 0.0
    %1152 = vmatprep.subr.mxu0 0.0
    %1153 = vmatpush2.msra.mxu0 0.0
    %1154 = vmatprep.subr.mxu0 0.0
    %1155 = vmatpush2.msra.mxu0 0.0
    %1156 = vmatprep.subr.mxu0 0.0
    %1157 = vmatpush2.msra.mxu0 0.0
    %1158 = vmatprep.subr.mxu0 0.0
    %1159 = vmatpush2.msra.mxu0 0.0
    %1160 = vmatprep.subr.mxu0 0.0
    %1161 = vmatpush2.msra.mxu0 0.0
    %1162 = vmatprep.mubr.f32.mxu0 0.0
    %1163 = vmatmul.mubr.f32.gmra.mxu0 %v599
    %v1164 = vpop.f32.mrf.mxu0
    %v1165 = vadd.f32 %v1094, %v1164
    %v1166 = vpop.f32.mrf.mxu0
    %v1167 = vadd.f32 %v1096, %v1166
    %1168 = vdwg.mxu0
    %v1169 = vmax.f32 %v881, 0.0
    %v1170 = vmax.f32 %v883, 0.0
    %v1171 = vmax.f32 %v1165, 0.0
    %v1172 = vmax.f32 %v1167, 0.0
    %v1173 = vld [vmem:[#allocation8] sm:$0xff]
    %v1174 = vld [vmem:[#allocation8 + $0x8] sm:$0xff]
    %v1175 = vld [vmem:[#allocation8 + $0x10] sm:$0xff]
    %v1176 = vld [vmem:[#allocation8 + $0x18] sm:$0xff]
    %v1177 = vld [vmem:[#allocation8 + $0x20] sm:$0xff]
    %v1178 = vld [vmem:[#allocation8 + $0x28] sm:$0xff]
    %v1179 = vld [vmem:[#allocation8 + $0x30] sm:$0xff]
    %v1180 = vld [vmem:[#allocation8 + $0x38] sm:$0xff]
    %v1181 = vld [vmem:[#allocation8 + $0x40] sm:$0xff]
    %v1182 = vld [vmem:[#allocation8 + $0x48] sm:$0xff]
    %v1183 = vld [vmem:[#allocation8 + $0x50] sm:$0xff]
    %v1184 = vld [vmem:[#allocation8 + $0x58] sm:$0xff]
    %v1185 = vld [vmem:[#allocation8 + $0x60] sm:$0xff]
    %v1186 = vld [vmem:[#allocation8 + $0x68] sm:$0xff]
    %v1187 = vld [vmem:[#allocation8 + $0x70] sm:$0xff]
    %v1188 = vld [vmem:[#allocation8 + $0x78] sm:$0xff]
    %v1189 = vld [vmem:[#allocation8 + $0x80] sm:$0xff]
    %v1190 = vld [vmem:[#allocation8 + $0x88] sm:$0xff]
    %v1191 = vld [vmem:[#allocation8 + $0x90] sm:$0xff]
    %v1192 = vld [vmem:[#allocation8 + $0x98] sm:$0xff]
    %v1193 = vld [vmem:[#allocation8 + $0xa0] sm:$0xff]
    %v1194 = vld [vmem:[#allocation8 + $0xa8] sm:$0xff]
    %v1195 = vld [vmem:[#allocation8 + $0xb0] sm:$0xff]
    %v1196 = vld [vmem:[#allocation8 + $0xb8] sm:$0xff]
    %v1197 = vld [vmem:[#allocation8 + $0xc0] sm:$0xff]
    %v1198 = vld [vmem:[#allocation8 + $0xc8] sm:$0xff]
    %v1199 = vld [vmem:[#allocation8 + $0xd0] sm:$0xff]
    %v1200 = vld [vmem:[#allocation8 + $0xd8] sm:$0xff]
    %v1201 = vld [vmem:[#allocation8 + $0xe0] sm:$0xff]
    %v1202 = vld [vmem:[#allocation8 + $0xe8] sm:$0xff]
    %v1203 = vld [vmem:[#allocation8 + $0xf0] sm:$0xff]
    %v1204 = vld [vmem:[#allocation8 + $0xf8] sm:$0xff]
    %v1205 = vld [vmem:[#allocation8 + $0x100] sm:$0xff]
    %v1206 = vld [vmem:[#allocation8 + $0x108] sm:$0xff]
    %v1207 = vld [vmem:[#allocation8 + $0x110] sm:$0xff]
    %v1208 = vld [vmem:[#allocation8 + $0x118] sm:$0xff]
    %v1209 = vld [vmem:[#allocation8 + $0x120] sm:$0xff]
    %v1210 = vld [vmem:[#allocation8 + $0x128] sm:$0xff]
    %v1211 = vld [vmem:[#allocation8 + $0x130] sm:$0xff]
    %v1212 = vld [vmem:[#allocation8 + $0x138] sm:$0xff]
    %v1213 = vld [vmem:[#allocation8 + $0x140] sm:$0xff]
    %v1214 = vld [vmem:[#allocation8 + $0x148] sm:$0xff]
    %v1215 = vld [vmem:[#allocation8 + $0x150] sm:$0xff]
    %v1216 = vld [vmem:[#allocation8 + $0x158] sm:$0xff]
    %v1217 = vld [vmem:[#allocation8 + $0x160] sm:$0xff]
    %v1218 = vld [vmem:[#allocation8 + $0x168] sm:$0xff]
    %v1219 = vld [vmem:[#allocation8 + $0x170] sm:$0xff]
    %v1220 = vld [vmem:[#allocation8 + $0x178] sm:$0xff]
    %v1221 = vld [vmem:[#allocation8 + $0x180] sm:$0xff]
    %v1222 = vld [vmem:[#allocation8 + $0x188] sm:$0xff]
    %v1223 = vld [vmem:[#allocation8 + $0x190] sm:$0xff]
    %v1224 = vld [vmem:[#allocation8 + $0x198] sm:$0xff]
    %v1225 = vld [vmem:[#allocation8 + $0x1a0] sm:$0xff]
    %v1226 = vld [vmem:[#allocation8 + $0x1a8] sm:$0xff]
    %v1227 = vld [vmem:[#allocation8 + $0x1b0] sm:$0xff]
    %v1228 = vld [vmem:[#allocation8 + $0x1b8] sm:$0xff]
    %v1229 = vld [vmem:[#allocation8 + $0x1c0] sm:$0xff]
    %v1230 = vld [vmem:[#allocation8 + $0x1c8] sm:$0xff]
    %v1231 = vld [vmem:[#allocation8 + $0x1d0] sm:$0xff]
    %v1232 = vld [vmem:[#allocation8 + $0x1d8] sm:$0xff]
    %v1233 = vld [vmem:[#allocation8 + $0x1e0] sm:$0xff]
    %v1234 = vld [vmem:[#allocation8 + $0x1e8] sm:$0xff]
    %v1235 = vld [vmem:[#allocation8 + $0x1f0] sm:$0xff]
    %v1236 = vld [vmem:[#allocation8 + $0x1f8] sm:$0xff]
    %v1237 = vld [vmem:[#allocation8 + $0x200] sm:$0xff]
    %v1238 = vld [vmem:[#allocation8 + $0x208] sm:$0xff]
    %v1239 = vld [vmem:[#allocation8 + $0x210] sm:$0xff]
    %v1240 = vld [vmem:[#allocation8 + $0x218] sm:$0xff]
    %v1241 = vld [vmem:[#allocation8 + $0x220] sm:$0xff]
    %v1242 = vld [vmem:[#allocation8 + $0x228] sm:$0xff]
    %v1243 = vld [vmem:[#allocation8 + $0x230] sm:$0xff]
    %v1244 = vld [vmem:[#allocation8 + $0x238] sm:$0xff]
    %v1245 = vld [vmem:[#allocation8 + $0x240] sm:$0xff]
    %v1246 = vld [vmem:[#allocation8 + $0x248] sm:$0xff]
    %v1247 = vld [vmem:[#allocation8 + $0x250] sm:$0xff]
    %v1248 = vld [vmem:[#allocation8 + $0x258] sm:$0xff]
    %v1249 = vld [vmem:[#allocation8 + $0x260] sm:$0xff]
    %v1250 = vld [vmem:[#allocation8 + $0x268] sm:$0xff]
    %v1251 = vld [vmem:[#allocation8 + $0x270] sm:$0xff]
    %v1252 = vld [vmem:[#allocation8 + $0x278] sm:$0xff]
    %v1253 = vld [vmem:[#allocation8 + $0x280] sm:$0xff]
    %v1254 = vld [vmem:[#allocation8 + $0x288] sm:$0xff]
    %v1255 = vld [vmem:[#allocation8 + $0x290] sm:$0xff]
    %v1256 = vld [vmem:[#allocation8 + $0x298] sm:$0xff]
    %v1257 = vld [vmem:[#allocation8 + $0x2a0] sm:$0xff]
    %v1258 = vld [vmem:[#allocation8 + $0x2a8] sm:$0xff]
    %v1259 = vld [vmem:[#allocation8 + $0x2b0] sm:$0xff]
    %v1260 = vld [vmem:[#allocation8 + $0x2b8] sm:$0xff]
    %v1261 = vld [vmem:[#allocation8 + $0x2c0] sm:$0xff]
    %v1262 = vld [vmem:[#allocation8 + $0x2c8] sm:$0xff]
    %v1263 = vld [vmem:[#allocation8 + $0x2d0] sm:$0xff]
    %v1264 = vld [vmem:[#allocation8 + $0x2d8] sm:$0xff]
    %v1265 = vld [vmem:[#allocation8 + $0x2e0] sm:$0xff]
    %v1266 = vld [vmem:[#allocation8 + $0x2e8] sm:$0xff]
    %v1267 = vld [vmem:[#allocation8 + $0x2f0] sm:$0xff]
    %v1268 = vld [vmem:[#allocation8 + $0x2f8] sm:$0xff]
    %v1269 = vld [vmem:[#allocation8 + $0x300] sm:$0xff]
    %v1270 = vld [vmem:[#allocation8 + $0x308] sm:$0xff]
    %v1271 = vld [vmem:[#allocation8 + $0x310] sm:$0xff]
    %v1272 = vld [vmem:[#allocation8 + $0x318] sm:$0xff]
    %v1273 = vld [vmem:[#allocation8 + $0x320] sm:$0xff]
    %v1274 = vld [vmem:[#allocation8 + $0x328] sm:$0xff]
    %v1275 = vld [vmem:[#allocation8 + $0x330] sm:$0xff]
    %v1276 = vld [vmem:[#allocation8 + $0x338] sm:$0xff]
    %v1277 = vld [vmem:[#allocation8 + $0x340] sm:$0xff]
    %v1278 = vld [vmem:[#allocation8 + $0x348] sm:$0xff]
    %v1279 = vld [vmem:[#allocation8 + $0x350] sm:$0xff]
    %v1280 = vld [vmem:[#allocation8 + $0x358] sm:$0xff]
    %v1281 = vld [vmem:[#allocation8 + $0x360] sm:$0xff]
    %v1282 = vld [vmem:[#allocation8 + $0x368] sm:$0xff]
    %v1283 = vld [vmem:[#allocation8 + $0x370] sm:$0xff]
    %v1284 = vld [vmem:[#allocation8 + $0x378] sm:$0xff]
    %v1285 = vld [vmem:[#allocation8 + $0x380] sm:$0xff]
    %v1286 = vld [vmem:[#allocation8 + $0x388] sm:$0xff]
    %v1287 = vld [vmem:[#allocation8 + $0x390] sm:$0xff]
    %v1288 = vld [vmem:[#allocation8 + $0x398] sm:$0xff]
    %v1289 = vld [vmem:[#allocation8 + $0x3a0] sm:$0xff]
    %v1290 = vld [vmem:[#allocation8 + $0x3a8] sm:$0xff]
    %v1291 = vld [vmem:[#allocation8 + $0x3b0] sm:$0xff]
    %v1292 = vld [vmem:[#allocation8 + $0x3b8] sm:$0xff]
    %v1293 = vld [vmem:[#allocation8 + $0x3c0] sm:$0xff]
    %v1294 = vld [vmem:[#allocation8 + $0x3c8] sm:$0xff]
    %v1295 = vld [vmem:[#allocation8 + $0x3d0] sm:$0xff]
    %v1296 = vld [vmem:[#allocation8 + $0x3d8] sm:$0xff]
    %v1297 = vld [vmem:[#allocation8 + $0x3e0] sm:$0xff]
    %v1298 = vld [vmem:[#allocation8 + $0x3e8] sm:$0xff]
    %v1299 = vld [vmem:[#allocation8 + $0x3f0] sm:$0xff]
    %v1300 = vld [vmem:[#allocation8 + $0x3f8] sm:$0xff]
    %v1301 = vld [vmem:[#allocation10] sm:$0x3]
    %v1303 = vlaneseq
    %v1304 = vshrl.u32 %v1303, 7
    %v1305 = vsub.s32 0, %v1304
    %v1306 = vrot.slane %v1301, %v1305
    %v1307 = vlaneseq
    %v1308 = vshrl.u32 %v1307, 7
    %v1309 = vsub.s32 1, %v1308
    %v1310 = vrot.slane %v1301, %v1309
    %1313 = vmatprep.subr.mxu0 %v1204
    %1314 = vmatpush1.msra.mxu0 %v1203
    %1315 = vmatprep.subr.mxu0 %v1202
    %1316 = vmatpush1.msra.mxu0 %v1201
    %1317 = vmatprep.subr.mxu0 %v1200
    %1318 = vmatpush1.msra.mxu0 %v1199
    %1319 = vmatprep.subr.mxu0 %v1198
    %1320 = vmatpush1.msra.mxu0 %v1197
    %1321 = vmatprep.subr.mxu0 %v1196
    %1322 = vmatpush1.msra.mxu0 %v1195
    %1323 = vmatprep.subr.mxu0 %v1194
    %1324 = vmatpush1.msra.mxu0 %v1193
    %1325 = vmatprep.subr.mxu0 %v1192
    %1326 = vmatpush1.msra.mxu0 %v1191
    %1327 = vmatprep.subr.mxu0 %v1190
    %1328 = vmatpush1.msra.mxu0 %v1189
    %1329 = vmatprep.subr.mxu0 %v1188
    %1330 = vmatpush1.msra.mxu0 %v1187
    %1331 = vmatprep.subr.mxu0 %v1186
    %1332 = vmatpush1.msra.mxu0 %v1185
    %1333 = vmatprep.subr.mxu0 %v1184
    %1334 = vmatpush1.msra.mxu0 %v1183
    %1335 = vmatprep.subr.mxu0 %v1182
    %1336 = vmatpush1.msra.mxu0 %v1181
    %1337 = vmatprep.subr.mxu0 %v1180
    %1338 = vmatpush1.msra.mxu0 %v1179
    %1339 = vmatprep.subr.mxu0 %v1178
    %1340 = vmatpush1.msra.mxu0 %v1177
    %1341 = vmatprep.subr.mxu0 %v1176
    %1342 = vmatpush1.msra.mxu0 %v1175
    %1343 = vmatprep.subr.mxu0 %v1174
    %1344 = vmatpush1.msra.mxu0 %v1173
    %1345 = vmatprep.subr.mxu0 %v1236
    %1346 = vmatpush2.msra.mxu0 %v1235
    %1347 = vmatprep.subr.mxu0 %v1234
    %1348 = vmatpush2.msra.mxu0 %v1233
    %1349 = vmatprep.subr.mxu0 %v1232
    %1350 = vmatpush2.msra.mxu0 %v1231
    %1351 = vmatprep.subr.mxu0 %v1230
    %1352 = vmatpush2.msra.mxu0 %v1229
    %1353 = vmatprep.subr.mxu0 %v1228
    %1354 = vmatpush2.msra.mxu0 %v1227
    %1355 = vmatprep.subr.mxu0 %v1226
    %1356 = vmatpush2.msra.mxu0 %v1225
    %1357 = vmatprep.subr.mxu0 %v1224
    %1358 = vmatpush2.msra.mxu0 %v1223
    %1359 = vmatprep.subr.mxu0 %v1222
    %1360 = vmatpush2.msra.mxu0 %v1221
    %1361 = vmatprep.subr.mxu0 %v1220
    %1362 = vmatpush2.msra.mxu0 %v1219
    %1363 = vmatprep.subr.mxu0 %v1218
    %1364 = vmatpush2.msra.mxu0 %v1217
    %1365 = vmatprep.subr.mxu0 %v1216
    %1366 = vmatpush2.msra.mxu0 %v1215
    %1367 = vmatprep.subr.mxu0 %v1214
    %1368 = vmatpush2.msra.mxu0 %v1213
    %1369 = vmatprep.subr.mxu0 %v1212
    %1370 = vmatpush2.msra.mxu0 %v1211
    %1371 = vmatprep.subr.mxu0 %v1210
    %1372 = vmatpush2.msra.mxu0 %v1209
    %1373 = vmatprep.subr.mxu0 %v1208
    %1374 = vmatpush2.msra.mxu0 %v1207
    %1375 = vmatprep.subr.mxu0 %v1206
    %1376 = vmatpush2.msra.mxu0 %v1205
    %1377 = vmatprep.mubr.f32.mxu0 %v1170
    %1378 = vmatmul.mubr.f32.gmra.mxu0 %v1169
    %v1379 = vpop.f32.mrf.mxu0
    %v1380 = vadd.f32 %v1306, %v1379
    %v1381 = vpop.f32.mrf.mxu0
    %v1382 = vadd.f32 %v1310, %v1381
    %1383 = vdwg.mxu0
    %1384 = vmatprep.subr.mxu0 %v1268
    %1385 = vmatpush1.msra.mxu0 %v1267
    %1386 = vmatprep.subr.mxu0 %v1266
    %1387 = vmatpush1.msra.mxu0 %v1265
    %1388 = vmatprep.subr.mxu0 %v1264
    %1389 = vmatpush1.msra.mxu0 %v1263
    %1390 = vmatprep.subr.mxu0 %v1262
    %1391 = vmatpush1.msra.mxu0 %v1261
    %1392 = vmatprep.subr.mxu0 %v1260
    %1393 = vmatpush1.msra.mxu0 %v1259
    %1394 = vmatprep.subr.mxu0 %v1258
    %1395 = vmatpush1.msra.mxu0 %v1257
    %1396 = vmatprep.subr.mxu0 %v1256
    %1397 = vmatpush1.msra.mxu0 %v1255
    %1398 = vmatprep.subr.mxu0 %v1254
    %1399 = vmatpush1.msra.mxu0 %v1253
    %1400 = vmatprep.subr.mxu0 %v1252
    %1401 = vmatpush1.msra.mxu0 %v1251
    %1402 = vmatprep.subr.mxu0 %v1250
    %1403 = vmatpush1.msra.mxu0 %v1249
    %1404 = vmatprep.subr.mxu0 %v1248
    %1405 = vmatpush1.msra.mxu0 %v1247
    %1406 = vmatprep.subr.mxu0 %v1246
    %1407 = vmatpush1.msra.mxu0 %v1245
    %1408 = vmatprep.subr.mxu0 %v1244
    %1409 = vmatpush1.msra.mxu0 %v1243
    %1410 = vmatprep.subr.mxu0 %v1242
    %1411 = vmatpush1.msra.mxu0 %v1241
    %1412 = vmatprep.subr.mxu0 %v1240
    %1413 = vmatpush1.msra.mxu0 %v1239
    %1414 = vmatprep.subr.mxu0 %v1238
    %1415 = vmatpush1.msra.mxu0 %v1237
    %1416 = vmatprep.subr.mxu0 %v1300
    %1417 = vmatpush2.msra.mxu0 %v1299
    %1418 = vmatprep.subr.mxu0 %v1298
    %1419 = vmatpush2.msra.mxu0 %v1297
    %1420 = vmatprep.subr.mxu0 %v1296
    %1421 = vmatpush2.msra.mxu0 %v1295
    %1422 = vmatprep.subr.mxu0 %v1294
    %1423 = vmatpush2.msra.mxu0 %v1293
    %1424 = vmatprep.subr.mxu0 %v1292
    %1425 = vmatpush2.msra.mxu0 %v1291
    %1426 = vmatprep.subr.mxu0 %v1290
    %1427 = vmatpush2.msra.mxu0 %v1289
    %1428 = vmatprep.subr.mxu0 %v1288
    %1429 = vmatpush2.msra.mxu0 %v1287
    %1430 = vmatprep.subr.mxu0 %v1286
    %1431 = vmatpush2.msra.mxu0 %v1285
    %1432 = vmatprep.subr.mxu0 %v1284
    %1433 = vmatpush2.msra.mxu0 %v1283
    %1434 = vmatprep.subr.mxu0 %v1282
    %1435 = vmatpush2.msra.mxu0 %v1281
    %1436 = vmatprep.subr.mxu0 %v1280
    %1437 = vmatpush2.msra.mxu0 %v1279
    %1438 = vmatprep.subr.mxu0 %v1278
    %1439 = vmatpush2.msra.mxu0 %v1277
    %1440 = vmatprep.subr.mxu0 %v1276
    %1441 = vmatpush2.msra.mxu0 %v1275
    %1442 = vmatprep.subr.mxu0 %v1274
    %1443 = vmatpush2.msra.mxu0 %v1273
    %1444 = vmatprep.subr.mxu0 %v1272
    %1445 = vmatpush2.msra.mxu0 %v1271
    %1446 = vmatprep.subr.mxu0 %v1270
    %1447 = vmatpush2.msra.mxu0 %v1269
    %1448 = vmatprep.mubr.f32.mxu0 %v1172
    %1449 = vmatmul.mubr.f32.gmra.mxu0 %v1171
    %v1450 = vpop.f32.mrf.mxu0
    %v1451 = vadd.f32 %v1380, %v1450
    %v1452 = vpop.f32.mrf.mxu0
    %v1453 = vadd.f32 %v1382, %v1452
    %1454 = vdwg.mxu0
    %v1455 = vmax.f32 %v1451, 0.0
    %v1456 = vmax.f32 %v1453, 0.0
    %v1457 = vld [vmem:[#allocation11] sm:$0xff]
    %v1458 = vld [vmem:[#allocation11 + $0x8] sm:$0xff]
    %v1459 = vld [vmem:[#allocation11 + $0x10] sm:$0xff]
    %v1460 = vld [vmem:[#allocation11 + $0x18] sm:$0xff]
    %v1461 = vld [vmem:[#allocation11 + $0x20] sm:$0xff]
    %v1462 = vld [vmem:[#allocation11 + $0x28] sm:$0xff]
    %v1463 = vld [vmem:[#allocation11 + $0x30] sm:$0xff]
    %v1464 = vld [vmem:[#allocation11 + $0x38] sm:$0xff]
    %v1465 = vld [vmem:[#allocation11 + $0x40] sm:$0xff]
    %v1466 = vld [vmem:[#allocation11 + $0x48] sm:$0xff]
    %v1467 = vld [vmem:[#allocation11 + $0x50] sm:$0xff]
    %v1468 = vld [vmem:[#allocation11 + $0x58] sm:$0xff]
    %v1469 = vld [vmem:[#allocation11 + $0x60] sm:$0xff]
    %v1470 = vld [vmem:[#allocation11 + $0x68] sm:$0xff]
    %v1471 = vld [vmem:[#allocation11 + $0x70] sm:$0xff]
    %v1472 = vld [vmem:[#allocation11 + $0x78] sm:$0xff]
    %v1473 = vld [vmem:[#allocation11 + $0x80] sm:$0xff]
    %v1474 = vld [vmem:[#allocation11 + $0x88] sm:$0xff]
    %v1475 = vld [vmem:[#allocation11 + $0x90] sm:$0xff]
    %v1476 = vld [vmem:[#allocation11 + $0x98] sm:$0xff]
    %v1477 = vld [vmem:[#allocation11 + $0xa0] sm:$0xff]
    %v1478 = vld [vmem:[#allocation11 + $0xa8] sm:$0xff]
    %v1479 = vld [vmem:[#allocation11 + $0xb0] sm:$0xff]
    %v1480 = vld [vmem:[#allocation11 + $0xb8] sm:$0xff]
    %v1481 = vld [vmem:[#allocation11 + $0xc0] sm:$0xff]
    %v1482 = vld [vmem:[#allocation11 + $0xc8] sm:$0xff]
    %v1483 = vld [vmem:[#allocation11 + $0xd0] sm:$0xff]
    %v1484 = vld [vmem:[#allocation11 + $0xd8] sm:$0xff]
    %v1485 = vld [vmem:[#allocation11 + $0xe0] sm:$0xff]
    %v1486 = vld [vmem:[#allocation11 + $0xe8] sm:$0xff]
    %v1487 = vld [vmem:[#allocation11 + $0xf0] sm:$0xff]
    %v1488 = vld [vmem:[#allocation11 + $0xf8] sm:$0xff]
    %v1489 = vld [vmem:[#allocation13] sm:$0x1]
    %v1491 = vlaneseq
    %v1492 = vshrl.u32 %v1491, 7
    %v1493 = vsub.s32 0, %v1492
    %v1494 = vrot.slane %v1489, %v1493
    %1496 = vmatprep.subr.mxu0 0.0
    %1497 = vmatpush1.msra.mxu0 %v1472
    %1498 = vmatprep.subr.mxu0 0.0
    %1499 = vmatpush1.msra.mxu0 %v1471
    %1500 = vmatprep.subr.mxu0 0.0
    %1501 = vmatpush1.msra.mxu0 %v1470
    %1502 = vmatprep.subr.mxu0 0.0
    %1503 = vmatpush1.msra.mxu0 %v1469
    %1504 = vmatprep.subr.mxu0 0.0
    %1505 = vmatpush1.msra.mxu0 %v1468
    %1506 = vmatprep.subr.mxu0 0.0
    %1507 = vmatpush1.msra.mxu0 %v1467
    %1508 = vmatprep.subr.mxu0 0.0
    %1509 = vmatpush1.msra.mxu0 %v1466
    %1510 = vmatprep.subr.mxu0 0.0
    %1511 = vmatpush1.msra.mxu0 %v1465
    %1512 = vmatprep.subr.mxu0 0.0
    %1513 = vmatpush1.msra.mxu0 %v1464
    %1514 = vmatprep.subr.mxu0 0.0
    %1515 = vmatpush1.msra.mxu0 %v1463
    %1516 = vmatprep.subr.mxu0 0.0
    %1517 = vmatpush1.msra.mxu0 %v1462
    %1518 = vmatprep.subr.mxu0 0.0
    %1519 = vmatpush1.msra.mxu0 %v1461
    %1520 = vmatprep.subr.mxu0 0.0
    %1521 = vmatpush1.msra.mxu0 %v1460
    %1522 = vmatprep.subr.mxu0 0.0
    %1523 = vmatpush1.msra.mxu0 %v1459
    %1524 = vmatprep.subr.mxu0 0.0
    %1525 = vmatpush1.msra.mxu0 %v1458
    %1526 = vmatprep.subr.mxu0 0.0
    %1527 = vmatpush1.msra.mxu0 %v1457
    %1528 = vmatprep.subr.mxu0 0.0
    %1529 = vmatpush2.msra.mxu0 %v1488
    %1530 = vmatprep.subr.mxu0 0.0
    %1531 = vmatpush2.msra.mxu0 %v1487
    %1532 = vmatprep.subr.mxu0 0.0
    %1533 = vmatpush2.msra.mxu0 %v1486
    %1534 = vmatprep.subr.mxu0 0.0
    %1535 = vmatpush2.msra.mxu0 %v1485
    %1536 = vmatprep.subr.mxu0 0.0
    %1537 = vmatpush2.msra.mxu0 %v1484
    %1538 = vmatprep.subr.mxu0 0.0
    %1539 = vmatpush2.msra.mxu0 %v1483
    %1540 = vmatprep.subr.mxu0 0.0
    %1541 = vmatpush2.msra.mxu0 %v1482
    %1542 = vmatprep.subr.mxu0 0.0
    %1543 = vmatpush2.msra.mxu0 %v1481
    %1544 = vmatprep.subr.mxu0 0.0
    %1545 = vmatpush2.msra.mxu0 %v1480
    %1546 = vmatprep.subr.mxu0 0.0
    %1547 = vmatpush2.msra.mxu0 %v1479
    %1548 = vmatprep.subr.mxu0 0.0
    %1549 = vmatpush2.msra.mxu0 %v1478
    %1550 = vmatprep.subr.mxu0 0.0
    %1551 = vmatpush2.msra.mxu0 %v1477
    %1552 = vmatprep.subr.mxu0 0.0
    %1553 = vmatpush2.msra.mxu0 %v1476
    %1554 = vmatprep.subr.mxu0 0.0
    %1555 = vmatpush2.msra.mxu0 %v1475
    %1556 = vmatprep.subr.mxu0 0.0
    %1557 = vmatpush2.msra.mxu0 %v1474
    %1558 = vmatprep.subr.mxu0 0.0
    %1559 = vmatpush2.msra.mxu0 %v1473
    %1560 = vmatprep.mubr.f32.mxu0 %v1456
    %1561 = vmatmul.mubr.f32.gmra.mxu0 %v1455
    %v1562 = vpop.f32.mrf.mxu0
    %v1563 = vadd.f32 %v1494, %v1562
    %v1564 = vpop.f32.mrf.mxu0
    %1565 = vdwg.mxu0
    %v1566 = vmax.f32 %v1563, 0.0
    %v1567 = vld [vmem:[#allocation14] sm:$0xff]
    %v1568 = vld [vmem:[#allocation14 + $0x8] sm:$0xff]
    %v1569 = vld [vmem:[#allocation14 + $0x10] sm:$0xff]
    %v1570 = vld [vmem:[#allocation14 + $0x18] sm:$0xff]
    %v1571 = vld [vmem:[#allocation14 + $0x20] sm:$0xff]
    %v1572 = vld [vmem:[#allocation14 + $0x28] sm:$0xff]
    %v1573 = vld [vmem:[#allocation14 + $0x30] sm:$0xff]
    %v1574 = vld [vmem:[#allocation14 + $0x38] sm:$0xff]
    %v1575 = vld [vmem:[#allocation14 + $0x40] sm:$0xff]
    %v1576 = vld [vmem:[#allocation14 + $0x48] sm:$0xff]
    %v1577 = vld [vmem:[#allocation14 + $0x50] sm:$0xff]
    %v1578 = vld [vmem:[#allocation14 + $0x58] sm:$0xff]
    %v1579 = vld [vmem:[#allocation14 + $0x60] sm:$0xff]
    %v1580 = vld [vmem:[#allocation14 + $0x68] sm:$0xff]
    %v1581 = vld [vmem:[#allocation14 + $0x70] sm:$0xff]
    %v1582 = vld [vmem:[#allocation14 + $0x78] sm:$0xff]
    %v1583 = vld [vmem:[#allocation16] sm:$0x1]
    %v1585 = vlaneseq
    %v1586 = vshrl.u32 %v1585, 7
    %v1587 = vsub.s32 0, %v1586
    %v1588 = vrot.slane %v1583, %v1587
    %1590 = vmatprep.subr.mxu0 0.0
    %1591 = vmatpush1.msra.mxu0 %v1582
    %1592 = vmatprep.subr.mxu0 0.0
    %1593 = vmatpush1.msra.mxu0 %v1581
    %1594 = vmatprep.subr.mxu0 0.0
    %1595 = vmatpush1.msra.mxu0 %v1580
    %1596 = vmatprep.subr.mxu0 0.0
    %1597 = vmatpush1.msra.mxu0 %v1579
    %1598 = vmatprep.subr.mxu0 0.0
    %1599 = vmatpush1.msra.mxu0 %v1578
    %1600 = vmatprep.subr.mxu0 0.0
    %1601 = vmatpush1.msra.mxu0 %v1577
    %1602 = vmatprep.subr.mxu0 0.0
    %1603 = vmatpush1.msra.mxu0 %v1576
    %1604 = vmatprep.subr.mxu0 0.0
    %1605 = vmatpush1.msra.mxu0 %v1575
    %1606 = vmatprep.subr.mxu0 0.0
    %1607 = vmatpush1.msra.mxu0 %v1574
    %1608 = vmatprep.subr.mxu0 0.0
    %1609 = vmatpush1.msra.mxu0 %v1573
    %1610 = vmatprep.subr.mxu0 0.0
    %1611 = vmatpush1.msra.mxu0 %v1572
    %1612 = vmatprep.subr.mxu0 0.0
    %1613 = vmatpush1.msra.mxu0 %v1571
    %1614 = vmatprep.subr.mxu0 0.0
    %1615 = vmatpush1.msra.mxu0 %v1570
    %1616 = vmatprep.subr.mxu0 0.0
    %1617 = vmatpush1.msra.mxu0 %v1569
    %1618 = vmatprep.subr.mxu0 0.0
    %1619 = vmatpush1.msra.mxu0 %v1568
    %1620 = vmatprep.subr.mxu0 0.0
    %1621 = vmatpush1.msra.mxu0 %v1567
    %1622 = vmatprep.subr.mxu0 0.0
    %1623 = vmatpush2.msra.mxu0 0.0
    %1624 = vmatprep.subr.mxu0 0.0
    %1625 = vmatpush2.msra.mxu0 0.0
    %1626 = vmatprep.subr.mxu0 0.0
    %1627 = vmatpush2.msra.mxu0 0.0
    %1628 = vmatprep.subr.mxu0 0.0
    %1629 = vmatpush2.msra.mxu0 0.0
    %1630 = vmatprep.subr.mxu0 0.0
    %1631 = vmatpush2.msra.mxu0 0.0
    %1632 = vmatprep.subr.mxu0 0.0
    %1633 = vmatpush2.msra.mxu0 0.0
    %1634 = vmatprep.subr.mxu0 0.0
    %1635 = vmatpush2.msra.mxu0 0.0
    %1636 = vmatprep.subr.mxu0 0.0
    %1637 = vmatpush2.msra.mxu0 0.0
    %1638 = vmatprep.subr.mxu0 0.0
    %1639 = vmatpush2.msra.mxu0 0.0
    %1640 = vmatprep.subr.mxu0 0.0
    %1641 = vmatpush2.msra.mxu0 0.0
    %1642 = vmatprep.subr.mxu0 0.0
    %1643 = vmatpush2.msra.mxu0 0.0
    %1644 = vmatprep.subr.mxu0 0.0
    %1645 = vmatpush2.msra.mxu0 0.0
    %1646 = vmatprep.subr.mxu0 0.0
    %1647 = vmatpush2.msra.mxu0 0.0
    %1648 = vmatprep.subr.mxu0 0.0
    %1649 = vmatpush2.msra.mxu0 0.0
    %1650 = vmatprep.subr.mxu0 0.0
    %1651 = vmatpush2.msra.mxu0 0.0
    %1652 = vmatprep.subr.mxu0 0.0
    %1653 = vmatpush2.msra.mxu0 0.0
    %1654 = vmatprep.mubr.f32.mxu0 0.0
    %1655 = vmatmul.mubr.f32.gmra.mxu0 %v1566
    %v1656 = vpop.f32.mrf.mxu0
    %v1657 = vadd.f32 %v1588, %v1656
    %v1658 = vpop.f32.mrf.mxu0
    %1659 = vdwg.mxu0
    %v1660 = vmax.f32 %v1657, 0.0
    %v1661 = vld [vmem:[#allocation17] sm:$0xff]
    %v1662 = vld [vmem:[#allocation17 + $0x8] sm:$0xff]
    %v1663 = vld [vmem:[#allocation17 + $0x10] sm:$0xff]
    %v1664 = vld [vmem:[#allocation17 + $0x18] sm:$0xff]
    %v1665 = vld [vmem:[#allocation17 + $0x20] sm:$0xff]
    %v1666 = vld [vmem:[#allocation17 + $0x28] sm:$0xff]
    %v1667 = vld [vmem:[#allocation17 + $0x30] sm:$0xff]
    %v1668 = vld [vmem:[#allocation17 + $0x38] sm:$0xff]
    %v1669 = vld [vmem:[#allocation17 + $0x40] sm:$0xff]
    %v1670 = vld [vmem:[#allocation17 + $0x48] sm:$0xff]
    %v1671 = vld [vmem:[#allocation17 + $0x50] sm:$0xff]
    %v1672 = vld [vmem:[#allocation17 + $0x58] sm:$0xff]
    %v1673 = vld [vmem:[#allocation17 + $0x60] sm:$0xff]
    %v1674 = vld [vmem:[#allocation17 + $0x68] sm:$0xff]
    %v1675 = vld [vmem:[#allocation17 + $0x70] sm:$0xff]
    %v1676 = vld [vmem:[#allocation17 + $0x78] sm:$0xff]
    %v1677 = vld [vmem:[#allocation19] sm:$0x1]
    %v1679 = vlaneseq
    %v1680 = vshrl.u32 %v1679, 7
    %v1681 = vsub.s32 0, %v1680
    %v1682 = vrot.slane %v1677, %v1681
    %1684 = vmatprep.subr.mxu0 0.0
    %1685 = vmatpush1.msra.mxu0 %v1676
    %1686 = vmatprep.subr.mxu0 0.0
    %1687 = vmatpush1.msra.mxu0 %v1675
    %1688 = vmatprep.subr.mxu0 0.0
    %1689 = vmatpush1.msra.mxu0 %v1674
    %1690 = vmatprep.subr.mxu0 0.0
    %1691 = vmatpush1.msra.mxu0 %v1673
    %1692 = vmatprep.subr.mxu0 0.0
    %1693 = vmatpush1.msra.mxu0 %v1672
    %1694 = vmatprep.subr.mxu0 0.0
    %1695 = vmatpush1.msra.mxu0 %v1671
    %1696 = vmatprep.subr.mxu0 0.0
    %1697 = vmatpush1.msra.mxu0 %v1670
    %1698 = vmatprep.subr.mxu0 0.0
    %1699 = vmatpush1.msra.mxu0 %v1669
    %1700 = vmatprep.subr.mxu0 0.0
    %1701 = vmatpush1.msra.mxu0 %v1668
    %1702 = vmatprep.subr.mxu0 0.0
    %1703 = vmatpush1.msra.mxu0 %v1667
    %1704 = vmatprep.subr.mxu0 0.0
    %1705 = vmatpush1.msra.mxu0 %v1666
    %1706 = vmatprep.subr.mxu0 0.0
    %1707 = vmatpush1.msra.mxu0 %v1665
    %1708 = vmatprep.subr.mxu0 0.0
    %1709 = vmatpush1.msra.mxu0 %v1664
    %1710 = vmatprep.subr.mxu0 0.0
    %1711 = vmatpush1.msra.mxu0 %v1663
    %1712 = vmatprep.subr.mxu0 0.0
    %1713 = vmatpush1.msra.mxu0 %v1662
    %1714 = vmatprep.subr.mxu0 0.0
    %1715 = vmatpush1.msra.mxu0 %v1661
    %1716 = vmatprep.subr.mxu0 0.0
    %1717 = vmatpush2.msra.mxu0 0.0
    %1718 = vmatprep.subr.mxu0 0.0
    %1719 = vmatpush2.msra.mxu0 0.0
    %1720 = vmatprep.subr.mxu0 0.0
    %1721 = vmatpush2.msra.mxu0 0.0
    %1722 = vmatprep.subr.mxu0 0.0
    %1723 = vmatpush2.msra.mxu0 0.0
    %1724 = vmatprep.subr.mxu0 0.0
    %1725 = vmatpush2.msra.mxu0 0.0
    %1726 = vmatprep.subr.mxu0 0.0
    %1727 = vmatpush2.msra.mxu0 0.0
    %1728 = vmatprep.subr.mxu0 0.0
    %1729 = vmatpush2.msra.mxu0 0.0
    %1730 = vmatprep.subr.mxu0 0.0
    %1731 = vmatpush2.msra.mxu0 0.0
    %1732 = vmatprep.subr.mxu0 0.0
    %1733 = vmatpush2.msra.mxu0 0.0
    %1734 = vmatprep.subr.mxu0 0.0
    %1735 = vmatpush2.msra.mxu0 0.0
    %1736 = vmatprep.subr.mxu0 0.0
    %1737 = vmatpush2.msra.mxu0 0.0
    %1738 = vmatprep.subr.mxu0 0.0
    %1739 = vmatpush2.msra.mxu0 0.0
    %1740 = vmatprep.subr.mxu0 0.0
    %1741 = vmatpush2.msra.mxu0 0.0
    %1742 = vmatprep.subr.mxu0 0.0
    %1743 = vmatpush2.msra.mxu0 0.0
    %1744 = vmatprep.subr.mxu0 0.0
    %1745 = vmatpush2.msra.mxu0 0.0
    %1746 = vmatprep.subr.mxu0 0.0
    %1747 = vmatpush2.msra.mxu0 0.0
    %1748 = vmatprep.mubr.f32.mxu0 0.0
    %1749 = vmatmul.mubr.f32.gmra.mxu0 %v1660
    %v1750 = vpop.f32.mrf.mxu0
    %v1751 = vadd.f32 %v1682, %v1750
    %v1752 = vpop.f32.mrf.mxu0
    %1753 = vdwg.mxu0
    %1754 = vst [vmem:[#allocation20] sm:$0xff] %v1751
    // Predicated region
    $region90: #{tpu_custom_call.1} parent=1 // pred_check
      _
    $region91: #{tpu_custom_call.1} parent=1 // pred_check_branch
      %1756 = sbr.rel (0) target = $region93
    $region92: #{tpu_custom_call.1} parent=1 // pred_region
      %s1758 = ssub.s32 128, 128
      %1759 = vsyncadd [#allocation4], %s1758
      %s1761 = sshll.u32 [#allocation20], 4
      %s1762 = int_to_ptr.vmem [resolvable:$true] %s1761
      %1764 = dma.vmem_to_hbm [thread:$0]  %s1762, 128, %s11, [#allocation4]
    $region93: #{tpu_custom_call.1} parent=1 // pred_fallthru
      _
    // Predicated region
    $region94: #{tpu_custom_call.1} parent=1 // pred_check
      _
    $region95: #{tpu_custom_call.1} parent=1 // pred_check_branch
      %1766 = sbr.rel (0) target = $region97
    $region96: #{tpu_custom_call.1} parent=1 // pred_region
      %1767 = dma.done [#allocation4], 128
    $region97: #{tpu_custom_call.1} parent=1 // pred_fallthru
      _
    %1768 = vsyncpa [#allocation3], 1
    %1769 = vsyncpa [#allocation6], 1
    %1770 = vsyncpa [#allocation9], 1
    %1771 = vsyncpa [#allocation12], 1
    %1772 = vsyncpa [#allocation15], 1
    %1773 = vsyncpa [#allocation18], 1
    %1774 = vsyncpa [#allocation4], 1

</llo_original>
